<compile_context>
chip_gen: v7x
topology: tpu7x:2x2x1
jax: 0.10.0
libtpu: 0.0.40
codegen_flags: <defaults>
</compile_context>

<pallas_src>
import functools

import jax
import jax.numpy as jnp
import numpy as np
from jax.experimental import pallas as pl
from jax.experimental.pallas import tpu as pltpu


def _round_up(x, m):
    return (x + m - 1) // m * m


def _resblock_kernel(B, H, W, C, S, res_scale, st_dtype,
                     x_ref, w1_ref, b1_ref, w2_ref, b2_ref, o_ref,
                     xst_ref, yst_ref):
    """One grid step processes B images.

    x_ref / o_ref : (B, H, W*C)     lane-dense activations (channels fastest)
    w*_ref        : (3, W*C, W*C)   banded conv matrices, one per kh row
    b*_ref        : (1, W*C)        f32 bias, tiled along W
    *st_ref       : (B*S + 8, W*C)  staging; image b's rows live at
                    [b*S + 8, b*S + 8 + H) (sublane-aligned starts), and the
                    zero bands in between supply the kh = +/-1 "same" padding.
    """
    WC = W * C
    f32 = jnp.float32

    # --- re-zero only the padding bands (tiny; done every step so it stays
    #     correct when the batch grid axis is sharded across TensorCores) ------
    for ref in (xst_ref, yst_ref):
        ref[0:8, :] = jnp.zeros((8, WC), st_dtype)
        for b in range(B):
            lo = b * S + 8 + H
            ref[lo:lo + (S - H), :] = jnp.zeros((S - H, WC), st_dtype)

    # --- stage the input block (single HBM read; one cast to the MXU dtype) ---
    for b in range(B):
        r0 = b * S + 8
        xst_ref[r0:r0 + H, :] = x_ref[b].astype(st_dtype)

    def conv3x3(src_ref, w_ref, bias_row, r0):
        # kw shifts + zero padding along W live inside the banded matrices;
        # only the kh row shift is expressed as contiguous sublane slices.
        acc = jnp.dot(src_ref[r0 - 1:r0 - 1 + H, :], w_ref[0],
                      preferred_element_type=f32)
        acc = acc + jnp.dot(src_ref[r0:r0 + H, :], w_ref[1],
                            preferred_element_type=f32)
        acc = acc + jnp.dot(src_ref[r0 + 1:r0 + 1 + H, :], w_ref[2],
                            preferred_element_type=f32)
        return acc + bias_row                      # f32 accumulator + f32 bias

    bias1 = b1_ref[...]
    bias2 = b2_ref[...]

    for b in range(B):
        r0 = b * S + 8
        # conv1 -> ReLU (on the f32 accumulator) -> stage for conv2
        y = jnp.maximum(conv3x3(xst_ref, w1_ref, bias1, r0), 0.0)
        yst_ref[r0:r0 + H, :] = y.astype(st_dtype)
        # conv2 -> residual (residual read from the resident x_ref block, f32)
        y = conv3x3(yst_ref, w2_ref, bias2, r0)
        res = y * res_scale + x_ref[b].astype(f32)
        o_ref[b] = res.astype(o_ref.dtype)         # lane-dense, aligned store


def _banded_matrices(w_hwio, W, dtype):
    """(3, 3, C, C) HWIO weights -> (3, W*C, W*C) banded matrices (one per kh).

    M[kh][(w+dw)*C + ci, w*C + co] = w_hwio[kh, dw+1, ci, co]; taps that fall
    outside [0, W) simply have no entry, which realizes "same" zero padding
    along W without any in-kernel masks.
    """
    C = w_hwio.shape[2]
    mats = []
    for kh in range(3):
        m = jnp.zeros((W * C, W * C), jnp.float32)
        for kw in range(3):
            dw = kw - 1
            m = m + jnp.kron(jnp.eye(W, k=-dw, dtype=jnp.float32),
                             w_hwio[kh, kw].astype(jnp.float32))
        mats.append(m)
    return jnp.stack(mats).astype(dtype)


def resblock_nhwc(x, w1, b1, w2, b2, *, res_scale=1.0,
                  compute_dtype=jnp.bfloat16, block_batch=None):
    """Hot-path entry point (NHWC end-to-end).

    x  : (N, H, W, C)
    w* : (3, 3, C, C)  HWIO conv weights
    b* : (C,) or (1, C) biases
    """
    N, H, W, C = x.shape
    WC = W * C
    S = _round_up(H, 8) + 8                       # per-image staging stride

    if block_batch is None:
        per_img = H * WC * jnp.dtype(x.dtype).itemsize
        block_batch = max(1, min(N, (2 << 20) // max(per_img, 1)))
        while N % block_batch:
            block_batch -= 1
    B = block_batch
    assert N % B == 0, "block_batch must divide N"
    R = B * S + 8                                 # staging rows

    x2 = x.reshape(N, H, WC)                      # free row-major repack -> lane-dense HBM blocks

    # One-time, weight-sized wrapper repacks (resident in VMEM via constant index_maps).
    w1m = _banded_matrices(jnp.asarray(w1), W, compute_dtype)
    w2m = _banded_matrices(jnp.asarray(w2), W, compute_dtype)
    b1r = jnp.tile(jnp.asarray(b1, jnp.float32).reshape(1, C), (1, W))
    b2r = jnp.tile(jnp.asarray(b2, jnp.float32).reshape(1, C), (1, W))

    # res_scale is a module-construction constant (as in the PyTorch module), so
    # it is baked into the kernel; use an SMEM scalar if it must vary at runtime.
    kernel = functools.partial(_resblock_kernel, B, H, W, C, S,
                               float(res_scale), compute_dtype)

    out = pl.pallas_call(
        kernel,
        out_shape=jax.ShapeDtypeStruct((N, H, WC), x.dtype),
        grid=(N // B,),
        in_specs=[
            pl.BlockSpec((B, H, WC), lambda n: (n, 0, 0)),
            pl.BlockSpec((3, WC, WC), lambda n: (0, 0, 0)),
            pl.BlockSpec((1, WC), lambda n: (0, 0)),
            pl.BlockSpec((3, WC, WC), lambda n: (0, 0, 0)),
            pl.BlockSpec((1, WC), lambda n: (0, 0)),
        ],
        out_specs=pl.BlockSpec((B, H, WC), lambda n: (n, 0, 0)),
        scratch_shapes=[
            pltpu.VMEM((R, WC), compute_dtype),   # padded, staged input
            pltpu.VMEM((R, WC), compute_dtype),   # padded, staged conv1+ReLU
        ],
        compiler_params=pltpu.CompilerParams(
            dimension_semantics=("parallel",),    # independent images -> megacore / dual-TC
            vmem_limit_bytes=32 * 1024 * 1024),   # fits v5e/v6e (128 MiB) and v7x (64 MiB)
    )(x2, w1m, b1r, w2m, b2r)
    return out.reshape(N, H, W, C)


def resblock_forward_nchw(x_nchw, params, res_scale=1.0, *,
                          compute_dtype=jnp.bfloat16, block_batch=None):
    """PyTorch-parity wrapper (NCHW in / NCHW out).

    NOTE: in a real pipeline call resblock_nhwc directly and keep the model
    NHWC end-to-end -- these transposes are HBM round trips for parity testing only.
    """
    x = jnp.transpose(x_nchw, (0, 2, 3, 1))               # NCHW -> NHWC
    y = resblock_nhwc(x, params["w1"], params["b1"], params["w2"], params["b2"],
                      res_scale=res_scale, compute_dtype=compute_dtype,
                      block_batch=block_batch)
    return jnp.transpose(y, (0, 3, 1, 2))                  # NHWC -> NCHW


def resblock_reference_nchw(x_nchw, params, res_scale=1.0):
    """Pure-JAX (XLA conv) reference, for verification only."""
    def conv(z_nchw, w_hwio, b):
        z = jnp.transpose(z_nchw, (0, 2, 3, 1))
        out = jax.lax.conv_general_dilated(
            z, w_hwio, window_strides=(1, 1), padding="SAME",
            dimension_numbers=("NHWC", "HWIO", "NHWC"))
        out = out + jnp.asarray(b).reshape(1, 1, 1, -1)
        return jnp.transpose(out, (0, 3, 1, 2))

    y = conv(x_nchw, params["w1"], params["b1"])
    y = jnp.maximum(y, 0.0)
    y = conv(y, params["w2"], params["b2"])
    return y * res_scale + x_nchw


if __name__ == "__main__":
    # Small deterministic setup: batch=2, n_feats=8, spatial=16x16 (W*C = 128 -> lane-dense blocks).
    n_feats, N, H, W = 8, 2, 16, 16
    res_scale = 1.0  # module default

    key = jax.random.PRNGKey(0)
    kx, kw1, kb1, kw2, kb2 = jax.random.split(key, 5)

    x_nchw = jax.random.normal(kx, (N, n_feats, H, W), dtype=jnp.float32)
    params = {
        # Conv weights generated directly in HWIO layout (kh, kw, cin, cout).
        "w1": 0.1 * jax.random.normal(kw1, (3, 3, n_feats, n_feats), jnp.float32),
        "b1": 0.1 * jax.random.normal(kb1, (1, n_feats), jnp.float32),
        "w2": 0.1 * jax.random.normal(kw2, (3, 3, n_feats, n_feats), jnp.float32),
        "b2": 0.1 * jax.random.normal(kb2, (1, n_feats), jnp.float32),
    }

    ref = jax.block_until_ready(resblock_reference_nchw(x_nchw, params, res_scale))

    # 1) f32 MXU / f32 staging path: strict check against the XLA conv reference.
    out_f32 = jax.block_until_ready(
        resblock_forward_nchw(x_nchw, params, res_scale, compute_dtype=jnp.float32))
    np.testing.assert_allclose(np.asarray(out_f32), np.asarray(ref),
                               rtol=5e-4, atol=5e-4)

    # 2) bf16 MXU operands + bf16 staging (recommended for v6e/v7x; safe on v5e
    #    now that the tap masks are gone): accumulation, bias, ReLU, res_scale
    #    and the residual add all stay f32.
    out_bf16 = jax.block_until_ready(
        resblock_forward_nchw(x_nchw, params, res_scale, compute_dtype=jnp.bfloat16))
    np.testing.assert_allclose(np.asarray(out_bf16), np.asarray(ref),
                               rtol=5e-2, atol=5e-2)

    print("KERNEL_OK")
</pallas_src>

<mosaic_0001>
module attributes {stable_mosaic.version = 11 : i64} {
  func.func @_resblock_kernel(%arg0: i32, %arg1: memref<2x16x128xf32, #tpu.memory_space<vmem>>, %arg2: memref<3x128x128xf32, #tpu.memory_space<vmem>>, %arg3: memref<1x128xf32, #tpu.memory_space<vmem>>, %arg4: memref<3x128x128xf32, #tpu.memory_space<vmem>>, %arg5: memref<1x128xf32, #tpu.memory_space<vmem>>, %arg6: memref<2x16x128xf32, #tpu.memory_space<vmem>>, %arg7: memref<56x128xf32, #tpu.memory_space<vmem>>, %arg8: memref<56x128xf32, #tpu.memory_space<vmem>>) attributes {dimension_semantics = [#tpu.dimension_semantics<parallel>], iteration_bounds = array<i64: 1>, scalar_prefetch = 0 : i64, scratch_operands = 2 : i64, tpu.core_type = #tpu.core_type<tc>, window_params = [{transform_indices = @transform_0, window_bounds = array<i64: 2, 16, 128>}, {pipeline_mode = #tpu.pipeline_mode<synchronous>, transform_indices = @transform_1, window_bounds = array<i64: 3, 128, 128>}, {pipeline_mode = #tpu.pipeline_mode<synchronous>, transform_indices = @transform_2, window_bounds = array<i64: 1, 128>}, {pipeline_mode = #tpu.pipeline_mode<synchronous>, transform_indices = @transform_3, window_bounds = array<i64: 3, 128, 128>}, {pipeline_mode = #tpu.pipeline_mode<synchronous>, transform_indices = @transform_4, window_bounds = array<i64: 1, 128>}, {transform_indices = @transform_5, window_bounds = array<i64: 2, 16, 128>}]} {
    %cst = arith.constant 0.000000e+00 : f32
    %0 = vector.broadcast %cst : f32 to vector<8x128xf32>
    %c0 = arith.constant 0 : index
    %c0_0 = arith.constant 0 : index
    %1 = vector.load %arg7[%c0, %c0_0] : memref<56x128xf32, #tpu.memory_space<vmem>>, vector<8x128xf32>
    tpu.vector_store %arg7[%c0, %c0_0], %0 {strides = array<i32>} : memref<56x128xf32, #tpu.memory_space<vmem>>, vector<8x128xf32>,
    %cst_1 = arith.constant 0.000000e+00 : f32
    %2 = vector.broadcast %cst_1 : f32 to vector<8x128xf32>
    %c24 = arith.constant 24 : index
    %c0_2 = arith.constant 0 : index
    %3 = vector.load %arg7[%c24, %c0_2] : memref<56x128xf32, #tpu.memory_space<vmem>>, vector<8x128xf32>
    tpu.vector_store %arg7[%c24, %c0_2], %2 {strides = array<i32>} : memref<56x128xf32, #tpu.memory_space<vmem>>, vector<8x128xf32>,
    %cst_3 = arith.constant 0.000000e+00 : f32
    %4 = vector.broadcast %cst_3 : f32 to vector<8x128xf32>
    %c48 = arith.constant 48 : index
    %c0_4 = arith.constant 0 : index
    %5 = vector.load %arg7[%c48, %c0_4] : memref<56x128xf32, #tpu.memory_space<vmem>>, vector<8x128xf32>
    tpu.vector_store %arg7[%c48, %c0_4], %4 {strides = array<i32>} : memref<56x128xf32, #tpu.memory_space<vmem>>, vector<8x128xf32>,
    %cst_5 = arith.constant 0.000000e+00 : f32
    %6 = vector.broadcast %cst_5 : f32 to vector<8x128xf32>
    %c0_6 = arith.constant 0 : index
    %c0_7 = arith.constant 0 : index
    %7 = vector.load %arg8[%c0_6, %c0_7] : memref<56x128xf32, #tpu.memory_space<vmem>>, vector<8x128xf32>
    tpu.vector_store %arg8[%c0_6, %c0_7], %6 {strides = array<i32>} : memref<56x128xf32, #tpu.memory_space<vmem>>, vector<8x128xf32>,
    %cst_8 = arith.constant 0.000000e+00 : f32
    %8 = vector.broadcast %cst_8 : f32 to vector<8x128xf32>
    %c24_9 = arith.constant 24 : index
    %c0_10 = arith.constant 0 : index
    %9 = vector.load %arg8[%c24_9, %c0_10] : memref<56x128xf32, #tpu.memory_space<vmem>>, vector<8x128xf32>
    tpu.vector_store %arg8[%c24_9, %c0_10], %8 {strides = array<i32>} : memref<56x128xf32, #tpu.memory_space<vmem>>, vector<8x128xf32>,
    %cst_11 = arith.constant 0.000000e+00 : f32
    %10 = vector.broadcast %cst_11 : f32 to vector<8x128xf32>
    %c48_12 = arith.constant 48 : index
    %c0_13 = arith.constant 0 : index
    %11 = vector.load %arg8[%c48_12, %c0_13] : memref<56x128xf32, #tpu.memory_space<vmem>>, vector<8x128xf32>
    tpu.vector_store %arg8[%c48_12, %c0_13], %10 {strides = array<i32>} : memref<56x128xf32, #tpu.memory_space<vmem>>, vector<8x128xf32>,
    %c0_14 = arith.constant 0 : index
    %c0_15 = arith.constant 0 : index
    %c0_16 = arith.constant 0 : index
    %12 = vector.load %arg1[%c0_14, %c0_15, %c0_16] : memref<2x16x128xf32, #tpu.memory_space<vmem>>, vector<1x16x128xf32>
    %13 = vector.shape_cast %12 : vector<1x16x128xf32> to vector<16x128xf32>
    %c8 = arith.constant 8 : index
    %c0_17 = arith.constant 0 : index
    %14 = vector.load %arg7[%c8, %c0_17] : memref<56x128xf32, #tpu.memory_space<vmem>>, vector<16x128xf32>
    tpu.vector_store %arg7[%c8, %c0_17], %13 {strides = array<i32>} : memref<56x128xf32, #tpu.memory_space<vmem>>, vector<16x128xf32>,
    %c1 = arith.constant 1 : index
    %c0_18 = arith.constant 0 : index
    %c0_19 = arith.constant 0 : index
    %15 = vector.load %arg1[%c1, %c0_18, %c0_19] : memref<2x16x128xf32, #tpu.memory_space<vmem>>, vector<1x16x128xf32>
    %16 = vector.shape_cast %15 : vector<1x16x128xf32> to vector<16x128xf32>
    %c32 = arith.constant 32 : index
    %c0_20 = arith.constant 0 : index
    %17 = vector.load %arg7[%c32, %c0_20] : memref<56x128xf32, #tpu.memory_space<vmem>>, vector<16x128xf32>
    tpu.vector_store %arg7[%c32, %c0_20], %16 {strides = array<i32>} : memref<56x128xf32, #tpu.memory_space<vmem>>, vector<16x128xf32>,
    %c0_21 = arith.constant 0 : index
    %c0_22 = arith.constant 0 : index
    %18 = vector.load %arg3[%c0_21, %c0_22] : memref<1x128xf32, #tpu.memory_space<vmem>>, vector<1x128xf32>
    %c0_23 = arith.constant 0 : index
    %c0_24 = arith.constant 0 : index
    %19 = vector.load %arg5[%c0_23, %c0_24] : memref<1x128xf32, #tpu.memory_space<vmem>>, vector<1x128xf32>
    %c7 = arith.constant 7 : index
    %c0_25 = arith.constant 0 : index
    %20 = vector.load %arg7[%c7, %c0_25] : memref<56x128xf32, #tpu.memory_space<vmem>>, vector<16x128xf32>
    %c0_26 = arith.constant 0 : index
    %c0_27 = arith.constant 0 : index
    %c0_28 = arith.constant 0 : index
    %21 = vector.load %arg2[%c0_26, %c0_27, %c0_28] : memref<3x128x128xf32, #tpu.memory_space<vmem>>, vector<1x128x128xf32>
    %22 = vector.shape_cast %21 : vector<1x128x128xf32> to vector<128x128xf32>
    %cst_29 = arith.constant dense<0.000000e+00> : vector<16x128xf32>
    %23 = tpu.matmul %20, %22, %cst_29 {dimension_numbers = #tpu.dot_dimension_numbers<[1], [0], [0], [1], [0, 0, 1, 1], [], []>} : vector<16x128xf32>, vector<128x128xf32>, vector<16x128xf32> -> vector<16x128xf32>
    %c8_30 = arith.constant 8 : index
    %c0_31 = arith.constant 0 : index
    %24 = vector.load %arg7[%c8_30, %c0_31] : memref<56x128xf32, #tpu.memory_space<vmem>>, vector<16x128xf32>
    %c1_32 = arith.constant 1 : index
    %c0_33 = arith.constant 0 : index
    %c0_34 = arith.constant 0 : index
    %25 = vector.load %arg2[%c1_32, %c0_33, %c0_34] : memref<3x128x128xf32, #tpu.memory_space<vmem>>, vector<1x128x128xf32>
    %26 = vector.shape_cast %25 : vector<1x128x128xf32> to vector<128x128xf32>
    %cst_35 = arith.constant dense<0.000000e+00> : vector<16x128xf32>
    %27 = tpu.matmul %24, %26, %cst_35 {dimension_numbers = #tpu.dot_dimension_numbers<[1], [0], [0], [1], [0, 0, 1, 1], [], []>} : vector<16x128xf32>, vector<128x128xf32>, vector<16x128xf32> -> vector<16x128xf32>
    %28 = arith.addf %23, %27 : vector<16x128xf32>
    %c9 = arith.constant 9 : index
    %c0_36 = arith.constant 0 : index
    %29 = vector.load %arg7[%c9, %c0_36] : memref<56x128xf32, #tpu.memory_space<vmem>>, vector<16x128xf32>
    %c2 = arith.constant 2 : index
    %c0_37 = arith.constant 0 : index
    %c0_38 = arith.constant 0 : index
    %30 = vector.load %arg2[%c2, %c0_37, %c0_38] : memref<3x128x128xf32, #tpu.memory_space<vmem>>, vector<1x128x128xf32>
    %31 = vector.shape_cast %30 : vector<1x128x128xf32> to vector<128x128xf32>
    %cst_39 = arith.constant dense<0.000000e+00> : vector<16x128xf32>
    %32 = tpu.matmul %29, %31, %cst_39 {dimension_numbers = #tpu.dot_dimension_numbers<[1], [0], [0], [1], [0, 0, 1, 1], [], []>} : vector<16x128xf32>, vector<128x128xf32>, vector<16x128xf32> -> vector<16x128xf32>
    %33 = arith.addf %28, %32 : vector<16x128xf32>
    %34 = vector.broadcast %18 : vector<1x128xf32> to vector<16x128xf32>
    %35 = arith.addf %33, %34 : vector<16x128xf32>
    %cst_40 = arith.constant 0.000000e+00 : f32
    %36 = vector.broadcast %cst_40 : f32 to vector<16x128xf32>
    %37 = arith.maximumf %35, %36 : vector<16x128xf32>
    %c8_41 = arith.constant 8 : index
    %c0_42 = arith.constant 0 : index
    %38 = vector.load %arg8[%c8_41, %c0_42] : memref<56x128xf32, #tpu.memory_space<vmem>>, vector<16x128xf32>
    tpu.vector_store %arg8[%c8_41, %c0_42], %37 {strides = array<i32>} : memref<56x128xf32, #tpu.memory_space<vmem>>, vector<16x128xf32>,
    %c7_43 = arith.constant 7 : index
    %c0_44 = arith.constant 0 : index
    %39 = vector.load %arg8[%c7_43, %c0_44] : memref<56x128xf32, #tpu.memory_space<vmem>>, vector<16x128xf32>
    %c0_45 = arith.constant 0 : index
    %c0_46 = arith.constant 0 : index
    %c0_47 = arith.constant 0 : index
    %40 = vector.load %arg4[%c0_45, %c0_46, %c0_47] : memref<3x128x128xf32, #tpu.memory_space<vmem>>, vector<1x128x128xf32>
    %41 = vector.shape_cast %40 : vector<1x128x128xf32> to vector<128x128xf32>
    %cst_48 = arith.constant dense<0.000000e+00> : vector<16x128xf32>
    %42 = tpu.matmul %39, %41, %cst_48 {dimension_numbers = #tpu.dot_dimension_numbers<[1], [0], [0], [1], [0, 0, 1, 1], [], []>} : vector<16x128xf32>, vector<128x128xf32>, vector<16x128xf32> -> vector<16x128xf32>
    %c8_49 = arith.constant 8 : index
    %c0_50 = arith.constant 0 : index
    %43 = vector.load %arg8[%c8_49, %c0_50] : memref<56x128xf32, #tpu.memory_space<vmem>>, vector<16x128xf32>
    %c1_51 = arith.constant 1 : index
    %c0_52 = arith.constant 0 : index
    %c0_53 = arith.constant 0 : index
    %44 = vector.load %arg4[%c1_51, %c0_52, %c0_53] : memref<3x128x128xf32, #tpu.memory_space<vmem>>, vector<1x128x128xf32>
    %45 = vector.shape_cast %44 : vector<1x128x128xf32> to vector<128x128xf32>
    %cst_54 = arith.constant dense<0.000000e+00> : vector<16x128xf32>
    %46 = tpu.matmul %43, %45, %cst_54 {dimension_numbers = #tpu.dot_dimension_numbers<[1], [0], [0], [1], [0, 0, 1, 1], [], []>} : vector<16x128xf32>, vector<128x128xf32>, vector<16x128xf32> -> vector<16x128xf32>
    %47 = arith.addf %42, %46 : vector<16x128xf32>
    %c9_55 = arith.constant 9 : index
    %c0_56 = arith.constant 0 : index
    %48 = vector.load %arg8[%c9_55, %c0_56] : memref<56x128xf32, #tpu.memory_space<vmem>>, vector<16x128xf32>
    %c2_57 = arith.constant 2 : index
    %c0_58 = arith.constant 0 : index
    %c0_59 = arith.constant 0 : index
    %49 = vector.load %arg4[%c2_57, %c0_58, %c0_59] : memref<3x128x128xf32, #tpu.memory_space<vmem>>, vector<1x128x128xf32>
    %50 = vector.shape_cast %49 : vector<1x128x128xf32> to vector<128x128xf32>
    %cst_60 = arith.constant dense<0.000000e+00> : vector<16x128xf32>
    %51 = tpu.matmul %48, %50, %cst_60 {dimension_numbers = #tpu.dot_dimension_numbers<[1], [0], [0], [1], [0, 0, 1, 1], [], []>} : vector<16x128xf32>, vector<128x128xf32>, vector<16x128xf32> -> vector<16x128xf32>
    %52 = arith.addf %47, %51 : vector<16x128xf32>
    %53 = vector.broadcast %19 : vector<1x128xf32> to vector<16x128xf32>
    %54 = arith.addf %52, %53 : vector<16x128xf32>
    %cst_61 = arith.constant 1.000000e+00 : f32
    %55 = vector.broadcast %cst_61 : f32 to vector<16x128xf32>
    %56 = arith.mulf %54, %55 : vector<16x128xf32>
    %c0_62 = arith.constant 0 : index
    %c0_63 = arith.constant 0 : index
    %c0_64 = arith.constant 0 : index
    %57 = vector.load %arg1[%c0_62, %c0_63, %c0_64] : memref<2x16x128xf32, #tpu.memory_space<vmem>>, vector<1x16x128xf32>
    %58 = vector.shape_cast %57 : vector<1x16x128xf32> to vector<16x128xf32>
    %59 = arith.addf %56, %58 : vector<16x128xf32>
    %c0_65 = arith.constant 0 : index
    %c0_66 = arith.constant 0 : index
    %c0_67 = arith.constant 0 : index
    %60 = vector.load %arg6[%c0_65, %c0_66, %c0_67] : memref<2x16x128xf32, #tpu.memory_space<vmem>>, vector<1x16x128xf32>
    %61 = vector.shape_cast %60 : vector<1x16x128xf32> to vector<16x128xf32>
    %62 = vector.shape_cast %59 : vector<16x128xf32> to vector<1x16x128xf32>
    tpu.vector_store %arg6[%c0_65, %c0_66, %c0_67], %62 {strides = array<i32>} : memref<2x16x128xf32, #tpu.memory_space<vmem>>, vector<1x16x128xf32>,
    %c31 = arith.constant 31 : index
    %c0_68 = arith.constant 0 : index
    %63 = vector.load %arg7[%c31, %c0_68] : memref<56x128xf32, #tpu.memory_space<vmem>>, vector<16x128xf32>
    %c0_69 = arith.constant 0 : index
    %c0_70 = arith.constant 0 : index
    %c0_71 = arith.constant 0 : index
    %64 = vector.load %arg2[%c0_69, %c0_70, %c0_71] : memref<3x128x128xf32, #tpu.memory_space<vmem>>, vector<1x128x128xf32>
    %65 = vector.shape_cast %64 : vector<1x128x128xf32> to vector<128x128xf32>
    %cst_72 = arith.constant dense<0.000000e+00> : vector<16x128xf32>
    %66 = tpu.matmul %63, %65, %cst_72 {dimension_numbers = #tpu.dot_dimension_numbers<[1], [0], [0], [1], [0, 0, 1, 1], [], []>} : vector<16x128xf32>, vector<128x128xf32>, vector<16x128xf32> -> vector<16x128xf32>
    %c32_73 = arith.constant 32 : index
    %c0_74 = arith.constant 0 : index
    %67 = vector.load %arg7[%c32_73, %c0_74] : memref<56x128xf32, #tpu.memory_space<vmem>>, vector<16x128xf32>
    %c1_75 = arith.constant 1 : index
    %c0_76 = arith.constant 0 : index
    %c0_77 = arith.constant 0 : index
    %68 = vector.load %arg2[%c1_75, %c0_76, %c0_77] : memref<3x128x128xf32, #tpu.memory_space<vmem>>, vector<1x128x128xf32>
    %69 = vector.shape_cast %68 : vector<1x128x128xf32> to vector<128x128xf32>
    %cst_78 = arith.constant dense<0.000000e+00> : vector<16x128xf32>
    %70 = tpu.matmul %67, %69, %cst_78 {dimension_numbers = #tpu.dot_dimension_numbers<[1], [0], [0], [1], [0, 0, 1, 1], [], []>} : vector<16x128xf32>, vector<128x128xf32>, vector<16x128xf32> -> vector<16x128xf32>
    %71 = arith.addf %66, %70 : vector<16x128xf32>
    %c33 = arith.constant 33 : index
    %c0_79 = arith.constant 0 : index
    %72 = vector.load %arg7[%c33, %c0_79] : memref<56x128xf32, #tpu.memory_space<vmem>>, vector<16x128xf32>
    %c2_80 = arith.constant 2 : index
    %c0_81 = arith.constant 0 : index
    %c0_82 = arith.constant 0 : index
    %73 = vector.load %arg2[%c2_80, %c0_81, %c0_82] : memref<3x128x128xf32, #tpu.memory_space<vmem>>, vector<1x128x128xf32>
    %74 = vector.shape_cast %73 : vector<1x128x128xf32> to vector<128x128xf32>
    %cst_83 = arith.constant dense<0.000000e+00> : vector<16x128xf32>
    %75 = tpu.matmul %72, %74, %cst_83 {dimension_numbers = #tpu.dot_dimension_numbers<[1], [0], [0], [1], [0, 0, 1, 1], [], []>} : vector<16x128xf32>, vector<128x128xf32>, vector<16x128xf32> -> vector<16x128xf32>
    %76 = arith.addf %71, %75 : vector<16x128xf32>
    %77 = vector.broadcast %18 : vector<1x128xf32> to vector<16x128xf32>
    %78 = arith.addf %76, %77 : vector<16x128xf32>
    %cst_84 = arith.constant 0.000000e+00 : f32
    %79 = vector.broadcast %cst_84 : f32 to vector<16x128xf32>
    %80 = arith.maximumf %78, %79 : vector<16x128xf32>
    %c32_85 = arith.constant 32 : index
    %c0_86 = arith.constant 0 : index
    %81 = vector.load %arg8[%c32_85, %c0_86] : memref<56x128xf32, #tpu.memory_space<vmem>>, vector<16x128xf32>
    tpu.vector_store %arg8[%c32_85, %c0_86], %80 {strides = array<i32>} : memref<56x128xf32, #tpu.memory_space<vmem>>, vector<16x128xf32>,
    %c31_87 = arith.constant 31 : index
    %c0_88 = arith.constant 0 : index
    %82 = vector.load %arg8[%c31_87, %c0_88] : memref<56x128xf32, #tpu.memory_space<vmem>>, vector<16x128xf32>
    %c0_89 = arith.constant 0 : index
    %c0_90 = arith.constant 0 : index
    %c0_91 = arith.constant 0 : index
    %83 = vector.load %arg4[%c0_89, %c0_90, %c0_91] : memref<3x128x128xf32, #tpu.memory_space<vmem>>, vector<1x128x128xf32>
    %84 = vector.shape_cast %83 : vector<1x128x128xf32> to vector<128x128xf32>
    %cst_92 = arith.constant dense<0.000000e+00> : vector<16x128xf32>
    %85 = tpu.matmul %82, %84, %cst_92 {dimension_numbers = #tpu.dot_dimension_numbers<[1], [0], [0], [1], [0, 0, 1, 1], [], []>} : vector<16x128xf32>, vector<128x128xf32>, vector<16x128xf32> -> vector<16x128xf32>
    %c32_93 = arith.constant 32 : index
    %c0_94 = arith.constant 0 : index
    %86 = vector.load %arg8[%c32_93, %c0_94] : memref<56x128xf32, #tpu.memory_space<vmem>>, vector<16x128xf32>
    %c1_95 = arith.constant 1 : index
    %c0_96 = arith.constant 0 : index
    %c0_97 = arith.constant 0 : index
    %87 = vector.load %arg4[%c1_95, %c0_96, %c0_97] : memref<3x128x128xf32, #tpu.memory_space<vmem>>, vector<1x128x128xf32>
    %88 = vector.shape_cast %87 : vector<1x128x128xf32> to vector<128x128xf32>
    %cst_98 = arith.constant dense<0.000000e+00> : vector<16x128xf32>
    %89 = tpu.matmul %86, %88, %cst_98 {dimension_numbers = #tpu.dot_dimension_numbers<[1], [0], [0], [1], [0, 0, 1, 1], [], []>} : vector<16x128xf32>, vector<128x128xf32>, vector<16x128xf32> -> vector<16x128xf32>
    %90 = arith.addf %85, %89 : vector<16x128xf32>
    %c33_99 = arith.constant 33 : index
    %c0_100 = arith.constant 0 : index
    %91 = vector.load %arg8[%c33_99, %c0_100] : memref<56x128xf32, #tpu.memory_space<vmem>>, vector<16x128xf32>
    %c2_101 = arith.constant 2 : index
    %c0_102 = arith.constant 0 : index
    %c0_103 = arith.constant 0 : index
    %92 = vector.load %arg4[%c2_101, %c0_102, %c0_103] : memref<3x128x128xf32, #tpu.memory_space<vmem>>, vector<1x128x128xf32>
    %93 = vector.shape_cast %92 : vector<1x128x128xf32> to vector<128x128xf32>
    %cst_104 = arith.constant dense<0.000000e+00> : vector<16x128xf32>
    %94 = tpu.matmul %91, %93, %cst_104 {dimension_numbers = #tpu.dot_dimension_numbers<[1], [0], [0], [1], [0, 0, 1, 1], [], []>} : vector<16x128xf32>, vector<128x128xf32>, vector<16x128xf32> -> vector<16x128xf32>
    %95 = arith.addf %90, %94 : vector<16x128xf32>
    %96 = vector.broadcast %19 : vector<1x128xf32> to vector<16x128xf32>
    %97 = arith.addf %95, %96 : vector<16x128xf32>
    %cst_105 = arith.constant 1.000000e+00 : f32
    %98 = vector.broadcast %cst_105 : f32 to vector<16x128xf32>
    %99 = arith.mulf %97, %98 : vector<16x128xf32>
    %c1_106 = arith.constant 1 : index
    %c0_107 = arith.constant 0 : index
    %c0_108 = arith.constant 0 : index
    %100 = vector.load %arg1[%c1_106, %c0_107, %c0_108] : memref<2x16x128xf32, #tpu.memory_space<vmem>>, vector<1x16x128xf32>
    %101 = vector.shape_cast %100 : vector<1x16x128xf32> to vector<16x128xf32>
    %102 = arith.addf %99, %101 : vector<16x128xf32>
    %c1_109 = arith.constant 1 : index
    %c0_110 = arith.constant 0 : index
    %c0_111 = arith.constant 0 : index
    %103 = vector.load %arg6[%c1_109, %c0_110, %c0_111] : memref<2x16x128xf32, #tpu.memory_space<vmem>>, vector<1x16x128xf32>
    %104 = vector.shape_cast %103 : vector<1x16x128xf32> to vector<16x128xf32>
    %105 = vector.shape_cast %102 : vector<16x128xf32> to vector<1x16x128xf32>
    tpu.vector_store %arg6[%c1_109, %c0_110, %c0_111], %105 {strides = array<i32>} : memref<2x16x128xf32, #tpu.memory_space<vmem>>, vector<1x16x128xf32>,
    return
  }
  func.func @transform_0(%arg0: i32) -> (i32, i32, i32) {
    %c0_i32 = arith.constant 0 : i32
    %c0_i32_0 = arith.constant 0 : i32
    %c0_i32_1 = arith.constant 0 : i32
    return %arg0, %c0_i32, %c0_i32_0 : i32, i32, i32
  }
  func.func @transform_1(%arg0: i32) -> (i32, i32, i32) {
    %c0_i32 = arith.constant 0 : i32
    %c0_i32_0 = arith.constant 0 : i32
    %c0_i32_1 = arith.constant 0 : i32
    %c0_i32_2 = arith.constant 0 : i32
    return %c0_i32, %c0_i32_0, %c0_i32_1 : i32, i32, i32
  }
  func.func @transform_2(%arg0: i32) -> (i32, i32) {
    %c0_i32 = arith.constant 0 : i32
    %c0_i32_0 = arith.constant 0 : i32
    %c0_i32_1 = arith.constant 0 : i32
    return %c0_i32, %c0_i32_0 : i32, i32
  }
  func.func @transform_3(%arg0: i32) -> (i32, i32, i32) {
    %c0_i32 = arith.constant 0 : i32
    %c0_i32_0 = arith.constant 0 : i32
    %c0_i32_1 = arith.constant 0 : i32
    %c0_i32_2 = arith.constant 0 : i32
    return %c0_i32, %c0_i32_0, %c0_i32_1 : i32, i32, i32
  }
  func.func @transform_4(%arg0: i32) -> (i32, i32) {
    %c0_i32 = arith.constant 0 : i32
    %c0_i32_0 = arith.constant 0 : i32
    %c0_i32_1 = arith.constant 0 : i32
    return %c0_i32, %c0_i32_0 : i32, i32
  }
  func.func @transform_5(%arg0: i32) -> (i32, i32, i32) {
    %c0_i32 = arith.constant 0 : i32
    %c0_i32_0 = arith.constant 0 : i32
    %c0_i32_1 = arith.constant 0 : i32
    return %arg0, %c0_i32, %c0_i32_0 : i32, i32, i32
  }
}

</mosaic_0001>

<llo_original>
// kernel: tpu_custom_call.1
$region0: #{tpu_custom_call.1}
  #allocation0 [shape = 'u32[]', space=smem, size = 0x4, offset = 0x4, fixed_abs, tag = 'smem constant byte address 0x4 - core index']
  #allocation1 [shape = 'u32[144,128]{1,0:T(1,128)}', space=vmem, size = 0x12000, scoped, tag = 'internal scratch']
  #allocation2 [shape = 'f32[56,128]{1,0:T(8,128)}', space=vmem, size = 0x7000, scoped, tag = 'scratch operand']
  #allocation3 [shape = 'f32[56,128]{1,0:T(8,128)}', space=vmem, size = 0x7000, scoped, tag = 'scratch operand']
  %s0 = inlined_call_operand.hbm [shape: f32[2,16,128], index: 0, kind: input, shape index: {}]
  %s1 = inlined_call_operand.hbm [shape: f32[3,128,128], index: 1, kind: input, shape index: {}]
  %s2 = inlined_call_operand.vmem [shape: f32[1,128], index: 2, kind: input, shape index: {}]
  %s3 = inlined_call_operand.hbm [shape: f32[3,128,128], index: 3, kind: input, shape index: {}]
  %s4 = inlined_call_operand.vmem [shape: f32[1,128], index: 4, kind: input, shape index: {}]
  %s5 = inlined_call_operand.hbm [shape: f32[2,16,128], index: 5, kind: output, shape index: {}]
  %s6 = sld [smem:[#allocation0]]
  $region42: #{tpu_custom_call.1} parent=0
    _
  %s8 = ssub.s32 1, %s6
  %s9 = scalar_select 0, %s8, %s6
  $region1: #{tpu_custom_call.1} parent=0
    #allocation4 [shape = 'u8[16384]{0}', space=vmem, size = 0x4000, scoped, tag = 'input window, operand 0, single buffered']
    #allocation5 [shape = 's32[1]{0}', space=sflag, size = 0x4, scoped, tag = 'scoped memory for tpu_custom_call.1']
    #allocation6 [shape = 's32[1]{0}', space=sflag, size = 0x4, scoped, tag = 'scoped memory for tpu_custom_call.1']
    #allocation7 [shape = 'u8[196608]{0}', space=vmem, size = 0x30000, scoped, tag = 'input window, operand 1, single buffered']
    #allocation8 [shape = 's32[1]{0}', space=sflag, size = 0x4, scoped, tag = 'scoped memory for tpu_custom_call.1']
    #allocation9 [shape = 'u8[196608]{0}', space=vmem, size = 0x30000, scoped, tag = 'input window, operand 3, single buffered']
    #allocation10 [shape = 'u8[16384]{0}', space=vmem, size = 0x4000, scoped, tag = 'output window, operand 0, single buffered']
    %10 = vsyncpa [#allocation5], 0
    %11 = vsyncpa [#allocation8], 0
    %12 = vsyncpa [#allocation6], 0
    // Predicated region
    $region2: #{tpu_custom_call.1} parent=1 // pred_check
      _
    $region3: #{tpu_custom_call.1} parent=1 // pred_check_branch
      %14 = sbr.rel (0) target = $region5
    $region4: #{tpu_custom_call.1} parent=1 // pred_region
      %s16 = ssub.s32 512, 512
      %17 = vsyncadd [#allocation5], %s16
      %s18 = sshll.u32 [#allocation4], 4
      %s19 = int_to_ptr.vmem [resolvable:$true] %s18
      %24 = dma.hbm_to_vmem [thread:$0]  %s0, 512, %s19, [#allocation5], 128, 128, 8
    $region5: #{tpu_custom_call.1} parent=1 // pred_fallthru
      _
    // Predicated region
    $region6: #{tpu_custom_call.1} parent=1 // pred_check
      _
    $region7: #{tpu_custom_call.1} parent=1 // pred_check_branch
      %26 = sbr.rel (0) target = $region9
    $region8: #{tpu_custom_call.1} parent=1 // pred_region
      %s28 = ssub.s32 6144, 6144
      %29 = vsyncadd [#allocation8], %s28
      %s30 = sshll.u32 [#allocation7], 4
      %s31 = int_to_ptr.vmem [resolvable:$true] %s30
      %36 = dma.hbm_to_vmem [thread:$0]  %s1, 6144, %s31, [#allocation8], 128, 128, 8
    $region9: #{tpu_custom_call.1} parent=1 // pred_fallthru
      _
    // Predicated region
    $region10: #{tpu_custom_call.1} parent=1 // pred_check
      _
    $region11: #{tpu_custom_call.1} parent=1 // pred_check_branch
      %38 = sbr.rel (0) target = $region13
    $region12: #{tpu_custom_call.1} parent=1 // pred_region
      _
    $region13: #{tpu_custom_call.1} parent=1 // pred_fallthru
      _
    // Predicated region
    $region14: #{tpu_custom_call.1} parent=1 // pred_check
      _
    $region15: #{tpu_custom_call.1} parent=1 // pred_check_branch
      %40 = sbr.rel (0) target = $region17
    $region16: #{tpu_custom_call.1} parent=1 // pred_region
      %s42 = ssub.s32 6144, 6144
      %43 = vsyncadd [#allocation8], %s42
      %s44 = sshll.u32 [#allocation9], 4
      %s45 = int_to_ptr.vmem [resolvable:$true] %s44
      %50 = dma.hbm_to_vmem [thread:$0]  %s3, 6144, %s45, [#allocation8], 128, 128, 8
    $region17: #{tpu_custom_call.1} parent=1 // pred_fallthru
      _
    // Predicated region
    $region18: #{tpu_custom_call.1} parent=1 // pred_check
      _
    $region19: #{tpu_custom_call.1} parent=1 // pred_check_branch
      %52 = sbr.rel (0) target = $region21
    $region20: #{tpu_custom_call.1} parent=1 // pred_region
      _
    $region21: #{tpu_custom_call.1} parent=1 // pred_fallthru
      _
    // Predicated region
    $region22: #{tpu_custom_call.1} parent=1 // pred_check
      _
    $region23: #{tpu_custom_call.1} parent=1 // pred_check_branch
      %54 = sbr.rel (0) target = $region25
    $region24: #{tpu_custom_call.1} parent=1 // pred_region
      %55 = dma.done [#allocation5], 512
    $region25: #{tpu_custom_call.1} parent=1 // pred_fallthru
      _
    // Predicated region
    $region26: #{tpu_custom_call.1} parent=1 // pred_check
      _
    $region27: #{tpu_custom_call.1} parent=1 // pred_check_branch
      %57 = sbr.rel (0) target = $region29
    $region28: #{tpu_custom_call.1} parent=1 // pred_region
      %58 = dma.done [#allocation8], 6144
    $region29: #{tpu_custom_call.1} parent=1 // pred_fallthru
      _
    // Predicated region
    $region30: #{tpu_custom_call.1} parent=1 // pred_check
      _
    $region31: #{tpu_custom_call.1} parent=1 // pred_check_branch
      %60 = sbr.rel (0) target = $region33
    $region32: #{tpu_custom_call.1} parent=1 // pred_region
      %61 = dma.done [#allocation8], 6144
    $region33: #{tpu_custom_call.1} parent=1 // pred_fallthru
      _
    %62 = vst [vmem:[#allocation2] sm:$0xff] 0.0
    %63 = vst [vmem:[#allocation2 + $0x18] sm:$0xff] 0.0
    %64 = vst [vmem:[#allocation2 + $0x30] sm:$0xff] 0.0
    %65 = vst [vmem:[#allocation3] sm:$0xff] 0.0
    %66 = vst [vmem:[#allocation3 + $0x18] sm:$0xff] 0.0
    %67 = vst [vmem:[#allocation3 + $0x30] sm:$0xff] 0.0
    %v68 = vld [vmem:[#allocation4] sm:$0xff]
    %v69 = vld [vmem:[#allocation4 + $0x8] sm:$0xff]
    %70 = vst [vmem:[#allocation2 + $0x8] sm:$0xff] %v68
    %71 = vst [vmem:[#allocation2 + $0x10] sm:$0xff] %v69
    %s72 = scalar_lea.vmem [#allocation4], 16
    %v73 = vld [vmem:[%s72] sm:$0xff]
    %v74 = vld [vmem:[%s72 + $0x8] sm:$0xff]
    %75 = vst [vmem:[#allocation2 + $0x20] sm:$0xff] %v73
    %76 = vst [vmem:[#allocation2 + $0x28] sm:$0xff] %v74
    %v77 = vld [vmem:[%s2] sm:$0x1]
    %v78 = vld [vmem:[%s4] sm:$0x1]
    %v79 = vld [vmem:[#allocation2 + $0x7] sm:$0xff]
    %v80 = vld [vmem:[#allocation2 + $0xf] sm:$0xff]
    %v81 = vld [vmem:[#allocation7] sm:$0xff]
    %v82 = vld [vmem:[#allocation7 + $0x8] sm:$0xff]
    %v83 = vld [vmem:[#allocation7 + $0x10] sm:$0xff]
    %v84 = vld [vmem:[#allocation7 + $0x18] sm:$0xff]
    %v85 = vld [vmem:[#allocation7 + $0x20] sm:$0xff]
    %v86 = vld [vmem:[#allocation7 + $0x28] sm:$0xff]
    %v87 = vld [vmem:[#allocation7 + $0x30] sm:$0xff]
    %v88 = vld [vmem:[#allocation7 + $0x38] sm:$0xff]
    %v89 = vld [vmem:[#allocation7 + $0x40] sm:$0xff]
    %v90 = vld [vmem:[#allocation7 + $0x48] sm:$0xff]
    %v91 = vld [vmem:[#allocation7 + $0x50] sm:$0xff]
    %v92 = vld [vmem:[#allocation7 + $0x58] sm:$0xff]
    %v93 = vld [vmem:[#allocation7 + $0x60] sm:$0xff]
    %v94 = vld [vmem:[#allocation7 + $0x68] sm:$0xff]
    %v95 = vld [vmem:[#allocation7 + $0x70] sm:$0xff]
    %v96 = vld [vmem:[#allocation7 + $0x78] sm:$0xff]
    %v97 = vld [vmem:[#allocation2 + $0x8] sm:$0xff]
    %v98 = vld [vmem:[#allocation2 + $0x10] sm:$0xff]
    %s99 = scalar_lea.vmem [#allocation7], 128
    %v100 = vld [vmem:[%s99] sm:$0xff]
    %v101 = vld [vmem:[%s99 + $0x8] sm:$0xff]
    %v102 = vld [vmem:[%s99 + $0x10] sm:$0xff]
    %v103 = vld [vmem:[%s99 + $0x18] sm:$0xff]
    %v104 = vld [vmem:[%s99 + $0x20] sm:$0xff]
    %v105 = vld [vmem:[%s99 + $0x28] sm:$0xff]
    %v106 = vld [vmem:[%s99 + $0x30] sm:$0xff]
    %v107 = vld [vmem:[%s99 + $0x38] sm:$0xff]
    %v108 = vld [vmem:[%s99 + $0x40] sm:$0xff]
    %v109 = vld [vmem:[%s99 + $0x48] sm:$0xff]
    %v110 = vld [vmem:[%s99 + $0x50] sm:$0xff]
    %v111 = vld [vmem:[%s99 + $0x58] sm:$0xff]
    %v112 = vld [vmem:[%s99 + $0x60] sm:$0xff]
    %v113 = vld [vmem:[%s99 + $0x68] sm:$0xff]
    %v114 = vld [vmem:[%s99 + $0x70] sm:$0xff]
    %v115 = vld [vmem:[%s99 + $0x78] sm:$0xff]
    %116 = vmatprep.subr.mxu0 0.0
    %117 = vmatpush1.msra.mxu0 %v100
    %118 = vmatprep.subr.mxu0 0.0
    %119 = vmatpush1.msra.mxu0 %v101
    %120 = vmatprep.subr.mxu0 0.0
    %121 = vmatpush1.msra.mxu0 %v102
    %122 = vmatprep.subr.mxu0 0.0
    %123 = vmatpush1.msra.mxu0 %v103
    %124 = vmatprep.subr.mxu0 0.0
    %125 = vmatpush1.msra.mxu0 %v104
    %126 = vmatprep.subr.mxu0 0.0
    %127 = vmatpush1.msra.mxu0 %v105
    %128 = vmatprep.subr.mxu0 0.0
    %129 = vmatpush1.msra.mxu0 %v106
    %130 = vmatprep.subr.mxu0 0.0
    %131 = vmatpush1.msra.mxu0 %v107
    %132 = vmatprep.subr.mxu0 0.0
    %133 = vmatpush1.msra.mxu0 %v108
    %134 = vmatprep.subr.mxu0 0.0
    %135 = vmatpush1.msra.mxu0 %v109
    %136 = vmatprep.subr.mxu0 0.0
    %137 = vmatpush1.msra.mxu0 %v110
    %138 = vmatprep.subr.mxu0 0.0
    %139 = vmatpush1.msra.mxu0 %v111
    %140 = vmatprep.subr.mxu0 0.0
    %141 = vmatpush1.msra.mxu0 %v112
    %142 = vmatprep.subr.mxu0 0.0
    %143 = vmatpush1.msra.mxu0 %v113
    %144 = vmatprep.subr.mxu0 0.0
    %145 = vmatpush1.msra.mxu0 %v114
    %146 = vmatprep.subr.mxu0 0.0
    %147 = vmatpush1.msra.mxu0 %v115
    %148 = vmatprep.subr.mxu0 0.0
    %149 = vmatpush1.msra.mxu0 0.0
    %150 = vmatprep.subr.mxu0 0.0
    %151 = vmatpush1.msra.mxu0 0.0
    %152 = vmatprep.subr.mxu0 0.0
    %153 = vmatpush1.msra.mxu0 0.0
    %154 = vmatprep.subr.mxu0 0.0
    %155 = vmatpush1.msra.mxu0 0.0
    %156 = vmatprep.subr.mxu0 0.0
    %157 = vmatpush1.msra.mxu0 0.0
    %158 = vmatprep.subr.mxu0 0.0
    %159 = vmatpush1.msra.mxu0 0.0
    %160 = vmatprep.subr.mxu0 0.0
    %161 = vmatpush1.msra.mxu0 0.0
    %162 = vmatprep.subr.mxu0 0.0
    %163 = vmatpush1.msra.mxu0 0.0
    %164 = vmatprep.subr.mxu0 0.0
    %165 = vmatpush1.msra.mxu0 0.0
    %166 = vmatprep.subr.mxu0 0.0
    %167 = vmatpush1.msra.mxu0 0.0
    %168 = vmatprep.subr.mxu0 0.0
    %169 = vmatpush1.msra.mxu0 0.0
    %170 = vmatprep.subr.mxu0 0.0
    %171 = vmatpush1.msra.mxu0 0.0
    %172 = vmatprep.subr.mxu0 0.0
    %173 = vmatpush1.msra.mxu0 0.0
    %174 = vmatprep.subr.mxu0 0.0
    %175 = vmatpush1.msra.mxu0 0.0
    %176 = vmatprep.subr.mxu0 0.0
    %177 = vmatpush1.msra.mxu0 0.0
    %178 = vmatprep.subr.mxu0 0.0
    %179 = vmatpush1.msra.mxu0 0.0
    %180 = vmatprep.mubr.f32.mxu0 0.0
    %181 = vmatmul.mubr.f32.gmra.mrb[0].mxu0 %v97
    %v182 = vpop.f32.mrb[0].mxu0
    %v183 = vadd.f32 0.0, %v182
    %v184 = vpop.f32.mrb[0].mxu0
    %185 = vmatprep.mubr.f32.mxu0 0.0
    %186 = vmatmul.mubr.f32.gmra.mrb[0].mxu0 %v98
    %v187 = vpop.f32.mrb[0].mxu0
    %v188 = vadd.f32 0.0, %v187
    %v189 = vpop.f32.mrb[0].mxu0
    %190 = vdwg.mxu0
    %191 = vmatprep.subr.mxu0 0.0
    %192 = vmatpush1.msra.mxu0 %v81
    %193 = vmatprep.subr.mxu0 0.0
    %194 = vmatpush1.msra.mxu0 %v82
    %195 = vmatprep.subr.mxu0 0.0
    %196 = vmatpush1.msra.mxu0 %v83
    %197 = vmatprep.subr.mxu0 0.0
    %198 = vmatpush1.msra.mxu0 %v84
    %199 = vmatprep.subr.mxu0 0.0
    %200 = vmatpush1.msra.mxu0 %v85
    %201 = vmatprep.subr.mxu0 0.0
    %202 = vmatpush1.msra.mxu0 %v86
    %203 = vmatprep.subr.mxu0 0.0
    %204 = vmatpush1.msra.mxu0 %v87
    %205 = vmatprep.subr.mxu0 0.0
    %206 = vmatpush1.msra.mxu0 %v88
    %207 = vmatprep.subr.mxu0 0.0
    %208 = vmatpush1.msra.mxu0 %v89
    %209 = vmatprep.subr.mxu0 0.0
    %210 = vmatpush1.msra.mxu0 %v90
    %211 = vmatprep.subr.mxu0 0.0
    %212 = vmatpush1.msra.mxu0 %v91
    %213 = vmatprep.subr.mxu0 0.0
    %214 = vmatpush1.msra.mxu0 %v92
    %215 = vmatprep.subr.mxu0 0.0
    %216 = vmatpush1.msra.mxu0 %v93
    %217 = vmatprep.subr.mxu0 0.0
    %218 = vmatpush1.msra.mxu0 %v94
    %219 = vmatprep.subr.mxu0 0.0
    %220 = vmatpush1.msra.mxu0 %v95
    %221 = vmatprep.subr.mxu0 0.0
    %222 = vmatpush1.msra.mxu0 %v96
    %223 = vmatprep.subr.mxu0 0.0
    %224 = vmatpush1.msra.mxu0 0.0
    %225 = vmatprep.subr.mxu0 0.0
    %226 = vmatpush1.msra.mxu0 0.0
    %227 = vmatprep.subr.mxu0 0.0
    %228 = vmatpush1.msra.mxu0 0.0
    %229 = vmatprep.subr.mxu0 0.0
    %230 = vmatpush1.msra.mxu0 0.0
    %231 = vmatprep.subr.mxu0 0.0
    %232 = vmatpush1.msra.mxu0 0.0
    %233 = vmatprep.subr.mxu0 0.0
    %234 = vmatpush1.msra.mxu0 0.0
    %235 = vmatprep.subr.mxu0 0.0
    %236 = vmatpush1.msra.mxu0 0.0
    %237 = vmatprep.subr.mxu0 0.0
    %238 = vmatpush1.msra.mxu0 0.0
    %239 = vmatprep.subr.mxu0 0.0
    %240 = vmatpush1.msra.mxu0 0.0
    %241 = vmatprep.subr.mxu0 0.0
    %242 = vmatpush1.msra.mxu0 0.0
    %243 = vmatprep.subr.mxu0 0.0
    %244 = vmatpush1.msra.mxu0 0.0
    %245 = vmatprep.subr.mxu0 0.0
    %246 = vmatpush1.msra.mxu0 0.0
    %247 = vmatprep.subr.mxu0 0.0
    %248 = vmatpush1.msra.mxu0 0.0
    %249 = vmatprep.subr.mxu0 0.0
    %250 = vmatpush1.msra.mxu0 0.0
    %251 = vmatprep.subr.mxu0 0.0
    %252 = vmatpush1.msra.mxu0 0.0
    %253 = vmatprep.subr.mxu0 0.0
    %254 = vmatpush1.msra.mxu0 0.0
    %255 = vmatprep.mubr.f32.mxu0 0.0
    %256 = vmatmul.mubr.f32.gmra.mrb[0].mxu0 %v79
    %v257 = vpop.f32.mrb[0].mxu0
    %v258 = vadd.f32 %v183, %v257
    %v259 = vpop.f32.mrb[0].mxu0
    %260 = vmatprep.mubr.f32.mxu0 0.0
    %261 = vmatmul.mubr.f32.gmra.mrb[0].mxu0 %v80
    %v262 = vpop.f32.mrb[0].mxu0
    %v263 = vadd.f32 %v188, %v262
    %v264 = vpop.f32.mrb[0].mxu0
    %265 = vdwg.mxu0
    %v266 = vld [vmem:[#allocation2 + $0x9] sm:$0xff]
    %v267 = vld [vmem:[#allocation2 + $0x11] sm:$0xff]
    %s268 = scalar_lea.vmem [#allocation7], 256
    %v269 = vld [vmem:[%s268] sm:$0xff]
    %v270 = vld [vmem:[%s268 + $0x8] sm:$0xff]
    %v271 = vld [vmem:[%s268 + $0x10] sm:$0xff]
    %v272 = vld [vmem:[%s268 + $0x18] sm:$0xff]
    %v273 = vld [vmem:[%s268 + $0x20] sm:$0xff]
    %v274 = vld [vmem:[%s268 + $0x28] sm:$0xff]
    %v275 = vld [vmem:[%s268 + $0x30] sm:$0xff]
    %v276 = vld [vmem:[%s268 + $0x38] sm:$0xff]
    %v277 = vld [vmem:[%s268 + $0x40] sm:$0xff]
    %v278 = vld [vmem:[%s268 + $0x48] sm:$0xff]
    %v279 = vld [vmem:[%s268 + $0x50] sm:$0xff]
    %v280 = vld [vmem:[%s268 + $0x58] sm:$0xff]
    %v281 = vld [vmem:[%s268 + $0x60] sm:$0xff]
    %v282 = vld [vmem:[%s268 + $0x68] sm:$0xff]
    %v283 = vld [vmem:[%s268 + $0x70] sm:$0xff]
    %v284 = vld [vmem:[%s268 + $0x78] sm:$0xff]
    %285 = vmatprep.subr.mxu0 0.0
    %286 = vmatpush1.msra.mxu0 %v269
    %287 = vmatprep.subr.mxu0 0.0
    %288 = vmatpush1.msra.mxu0 %v270
    %289 = vmatprep.subr.mxu0 0.0
    %290 = vmatpush1.msra.mxu0 %v271
    %291 = vmatprep.subr.mxu0 0.0
    %292 = vmatpush1.msra.mxu0 %v272
    %293 = vmatprep.subr.mxu0 0.0
    %294 = vmatpush1.msra.mxu0 %v273
    %295 = vmatprep.subr.mxu0 0.0
    %296 = vmatpush1.msra.mxu0 %v274
    %297 = vmatprep.subr.mxu0 0.0
    %298 = vmatpush1.msra.mxu0 %v275
    %299 = vmatprep.subr.mxu0 0.0
    %300 = vmatpush1.msra.mxu0 %v276
    %301 = vmatprep.subr.mxu0 0.0
    %302 = vmatpush1.msra.mxu0 %v277
    %303 = vmatprep.subr.mxu0 0.0
    %304 = vmatpush1.msra.mxu0 %v278
    %305 = vmatprep.subr.mxu0 0.0
    %306 = vmatpush1.msra.mxu0 %v279
    %307 = vmatprep.subr.mxu0 0.0
    %308 = vmatpush1.msra.mxu0 %v280
    %309 = vmatprep.subr.mxu0 0.0
    %310 = vmatpush1.msra.mxu0 %v281
    %311 = vmatprep.subr.mxu0 0.0
    %312 = vmatpush1.msra.mxu0 %v282
    %313 = vmatprep.subr.mxu0 0.0
    %314 = vmatpush1.msra.mxu0 %v283
    %315 = vmatprep.subr.mxu0 0.0
    %316 = vmatpush1.msra.mxu0 %v284
    %317 = vmatprep.subr.mxu0 0.0
    %318 = vmatpush1.msra.mxu0 0.0
    %319 = vmatprep.subr.mxu0 0.0
    %320 = vmatpush1.msra.mxu0 0.0
    %321 = vmatprep.subr.mxu0 0.0
    %322 = vmatpush1.msra.mxu0 0.0
    %323 = vmatprep.subr.mxu0 0.0
    %324 = vmatpush1.msra.mxu0 0.0
    %325 = vmatprep.subr.mxu0 0.0
    %326 = vmatpush1.msra.mxu0 0.0
    %327 = vmatprep.subr.mxu0 0.0
    %328 = vmatpush1.msra.mxu0 0.0
    %329 = vmatprep.subr.mxu0 0.0
    %330 = vmatpush1.msra.mxu0 0.0
    %331 = vmatprep.subr.mxu0 0.0
    %332 = vmatpush1.msra.mxu0 0.0
    %333 = vmatprep.subr.mxu0 0.0
    %334 = vmatpush1.msra.mxu0 0.0
    %335 = vmatprep.subr.mxu0 0.0
    %336 = vmatpush1.msra.mxu0 0.0
    %337 = vmatprep.subr.mxu0 0.0
    %338 = vmatpush1.msra.mxu0 0.0
    %339 = vmatprep.subr.mxu0 0.0
    %340 = vmatpush1.msra.mxu0 0.0
    %341 = vmatprep.subr.mxu0 0.0
    %342 = vmatpush1.msra.mxu0 0.0
    %343 = vmatprep.subr.mxu0 0.0
    %344 = vmatpush1.msra.mxu0 0.0
    %345 = vmatprep.subr.mxu0 0.0
    %346 = vmatpush1.msra.mxu0 0.0
    %347 = vmatprep.subr.mxu0 0.0
    %348 = vmatpush1.msra.mxu0 0.0
    %349 = vmatprep.mubr.f32.mxu0 0.0
    %350 = vmatmul.mubr.f32.gmra.mrb[0].mxu0 %v266
    %v351 = vpop.f32.mrb[0].mxu0
    %v352 = vadd.f32 0.0, %v351
    %v353 = vpop.f32.mrb[0].mxu0
    %354 = vmatprep.mubr.f32.mxu0 0.0
    %355 = vmatmul.mubr.f32.gmra.mrb[0].mxu0 %v267
    %v356 = vpop.f32.mrb[0].mxu0
    %v357 = vadd.f32 0.0, %v356
    %v358 = vpop.f32.mrb[0].mxu0
    %359 = vdwg.mxu0
    %v360 = vadd.f32 %v258, %v352
    %v361 = vadd.f32 %v263, %v357
    %v363 = vlaneseq
    %v364 = vshrl.u32 %v363, 7
    %v365 = vsub.s32 0, %v364
    %v366 = vrot.slane %v77, %v365
    %v368 = vadd.f32 %v360, %v366
    %v369 = vadd.f32 %v361, %v366
    %v370 = vmax.f32 %v368, 0.0
    %v371 = vmax.f32 %v369, 0.0
    %372 = vst [vmem:[#allocation3 + $0x8] sm:$0xff] %v370
    %373 = vst [vmem:[#allocation3 + $0x10] sm:$0xff] %v371
    %v374 = vld [vmem:[#allocation3 + $0x7] sm:$0xff]
    %v375 = vld [vmem:[#allocation3 + $0xf] sm:$0xff]
    %v376 = vld [vmem:[#allocation9] sm:$0xff]
    %v377 = vld [vmem:[#allocation9 + $0x8] sm:$0xff]
    %v378 = vld [vmem:[#allocation9 + $0x10] sm:$0xff]
    %v379 = vld [vmem:[#allocation9 + $0x18] sm:$0xff]
    %v380 = vld [vmem:[#allocation9 + $0x20] sm:$0xff]
    %v381 = vld [vmem:[#allocation9 + $0x28] sm:$0xff]
    %v382 = vld [vmem:[#allocation9 + $0x30] sm:$0xff]
    %v383 = vld [vmem:[#allocation9 + $0x38] sm:$0xff]
    %v384 = vld [vmem:[#allocation9 + $0x40] sm:$0xff]
    %v385 = vld [vmem:[#allocation9 + $0x48] sm:$0xff]
    %v386 = vld [vmem:[#allocation9 + $0x50] sm:$0xff]
    %v387 = vld [vmem:[#allocation9 + $0x58] sm:$0xff]
    %v388 = vld [vmem:[#allocation9 + $0x60] sm:$0xff]
    %v389 = vld [vmem:[#allocation9 + $0x68] sm:$0xff]
    %v390 = vld [vmem:[#allocation9 + $0x70] sm:$0xff]
    %v391 = vld [vmem:[#allocation9 + $0x78] sm:$0xff]
    %v392 = vld [vmem:[#allocation3 + $0x8] sm:$0xff]
    %v393 = vld [vmem:[#allocation3 + $0x10] sm:$0xff]
    %s394 = scalar_lea.vmem [#allocation9], 128
    %v395 = vld [vmem:[%s394] sm:$0xff]
    %v396 = vld [vmem:[%s394 + $0x8] sm:$0xff]
    %v397 = vld [vmem:[%s394 + $0x10] sm:$0xff]
    %v398 = vld [vmem:[%s394 + $0x18] sm:$0xff]
    %v399 = vld [vmem:[%s394 + $0x20] sm:$0xff]
    %v400 = vld [vmem:[%s394 + $0x28] sm:$0xff]
    %v401 = vld [vmem:[%s394 + $0x30] sm:$0xff]
    %v402 = vld [vmem:[%s394 + $0x38] sm:$0xff]
    %v403 = vld [vmem:[%s394 + $0x40] sm:$0xff]
    %v404 = vld [vmem:[%s394 + $0x48] sm:$0xff]
    %v405 = vld [vmem:[%s394 + $0x50] sm:$0xff]
    %v406 = vld [vmem:[%s394 + $0x58] sm:$0xff]
    %v407 = vld [vmem:[%s394 + $0x60] sm:$0xff]
    %v408 = vld [vmem:[%s394 + $0x68] sm:$0xff]
    %v409 = vld [vmem:[%s394 + $0x70] sm:$0xff]
    %v410 = vld [vmem:[%s394 + $0x78] sm:$0xff]
    %411 = vmatprep.subr.mxu0 0.0
    %412 = vmatpush1.msra.mxu0 %v395
    %413 = vmatprep.subr.mxu0 0.0
    %414 = vmatpush1.msra.mxu0 %v396
    %415 = vmatprep.subr.mxu0 0.0
    %416 = vmatpush1.msra.mxu0 %v397
    %417 = vmatprep.subr.mxu0 0.0
    %418 = vmatpush1.msra.mxu0 %v398
    %419 = vmatprep.subr.mxu0 0.0
    %420 = vmatpush1.msra.mxu0 %v399
    %421 = vmatprep.subr.mxu0 0.0
    %422 = vmatpush1.msra.mxu0 %v400
    %423 = vmatprep.subr.mxu0 0.0
    %424 = vmatpush1.msra.mxu0 %v401
    %425 = vmatprep.subr.mxu0 0.0
    %426 = vmatpush1.msra.mxu0 %v402
    %427 = vmatprep.subr.mxu0 0.0
    %428 = vmatpush1.msra.mxu0 %v403
    %429 = vmatprep.subr.mxu0 0.0
    %430 = vmatpush1.msra.mxu0 %v404
    %431 = vmatprep.subr.mxu0 0.0
    %432 = vmatpush1.msra.mxu0 %v405
    %433 = vmatprep.subr.mxu0 0.0
    %434 = vmatpush1.msra.mxu0 %v406
    %435 = vmatprep.subr.mxu0 0.0
    %436 = vmatpush1.msra.mxu0 %v407
    %437 = vmatprep.subr.mxu0 0.0
    %438 = vmatpush1.msra.mxu0 %v408
    %439 = vmatprep.subr.mxu0 0.0
    %440 = vmatpush1.msra.mxu0 %v409
    %441 = vmatprep.subr.mxu0 0.0
    %442 = vmatpush1.msra.mxu0 %v410
    %443 = vmatprep.subr.mxu0 0.0
    %444 = vmatpush1.msra.mxu0 0.0
    %445 = vmatprep.subr.mxu0 0.0
    %446 = vmatpush1.msra.mxu0 0.0
    %447 = vmatprep.subr.mxu0 0.0
    %448 = vmatpush1.msra.mxu0 0.0
    %449 = vmatprep.subr.mxu0 0.0
    %450 = vmatpush1.msra.mxu0 0.0
    %451 = vmatprep.subr.mxu0 0.0
    %452 = vmatpush1.msra.mxu0 0.0
    %453 = vmatprep.subr.mxu0 0.0
    %454 = vmatpush1.msra.mxu0 0.0
    %455 = vmatprep.subr.mxu0 0.0
    %456 = vmatpush1.msra.mxu0 0.0
    %457 = vmatprep.subr.mxu0 0.0
    %458 = vmatpush1.msra.mxu0 0.0
    %459 = vmatprep.subr.mxu0 0.0
    %460 = vmatpush1.msra.mxu0 0.0
    %461 = vmatprep.subr.mxu0 0.0
    %462 = vmatpush1.msra.mxu0 0.0
    %463 = vmatprep.subr.mxu0 0.0
    %464 = vmatpush1.msra.mxu0 0.0
    %465 = vmatprep.subr.mxu0 0.0
    %466 = vmatpush1.msra.mxu0 0.0
    %467 = vmatprep.subr.mxu0 0.0
    %468 = vmatpush1.msra.mxu0 0.0
    %469 = vmatprep.subr.mxu0 0.0
    %470 = vmatpush1.msra.mxu0 0.0
    %471 = vmatprep.subr.mxu0 0.0
    %472 = vmatpush1.msra.mxu0 0.0
    %473 = vmatprep.subr.mxu0 0.0
    %474 = vmatpush1.msra.mxu0 0.0
    %475 = vmatprep.mubr.f32.mxu0 0.0
    %476 = vmatmul.mubr.f32.gmra.mrb[0].mxu0 %v392
    %v477 = vpop.f32.mrb[0].mxu0
    %v478 = vadd.f32 0.0, %v477
    %v479 = vpop.f32.mrb[0].mxu0
    %480 = vmatprep.mubr.f32.mxu0 0.0
    %481 = vmatmul.mubr.f32.gmra.mrb[0].mxu0 %v393
    %v482 = vpop.f32.mrb[0].mxu0
    %v483 = vadd.f32 0.0, %v482
    %v484 = vpop.f32.mrb[0].mxu0
    %485 = vdwg.mxu0
    %486 = vmatprep.subr.mxu0 0.0
    %487 = vmatpush1.msra.mxu0 %v376
    %488 = vmatprep.subr.mxu0 0.0
    %489 = vmatpush1.msra.mxu0 %v377
    %490 = vmatprep.subr.mxu0 0.0
    %491 = vmatpush1.msra.mxu0 %v378
    %492 = vmatprep.subr.mxu0 0.0
    %493 = vmatpush1.msra.mxu0 %v379
    %494 = vmatprep.subr.mxu0 0.0
    %495 = vmatpush1.msra.mxu0 %v380
    %496 = vmatprep.subr.mxu0 0.0
    %497 = vmatpush1.msra.mxu0 %v381
    %498 = vmatprep.subr.mxu0 0.0
    %499 = vmatpush1.msra.mxu0 %v382
    %500 = vmatprep.subr.mxu0 0.0
    %501 = vmatpush1.msra.mxu0 %v383
    %502 = vmatprep.subr.mxu0 0.0
    %503 = vmatpush1.msra.mxu0 %v384
    %504 = vmatprep.subr.mxu0 0.0
    %505 = vmatpush1.msra.mxu0 %v385
    %506 = vmatprep.subr.mxu0 0.0
    %507 = vmatpush1.msra.mxu0 %v386
    %508 = vmatprep.subr.mxu0 0.0
    %509 = vmatpush1.msra.mxu0 %v387
    %510 = vmatprep.subr.mxu0 0.0
    %511 = vmatpush1.msra.mxu0 %v388
    %512 = vmatprep.subr.mxu0 0.0
    %513 = vmatpush1.msra.mxu0 %v389
    %514 = vmatprep.subr.mxu0 0.0
    %515 = vmatpush1.msra.mxu0 %v390
    %516 = vmatprep.subr.mxu0 0.0
    %517 = vmatpush1.msra.mxu0 %v391
    %518 = vmatprep.subr.mxu0 0.0
    %519 = vmatpush1.msra.mxu0 0.0
    %520 = vmatprep.subr.mxu0 0.0
    %521 = vmatpush1.msra.mxu0 0.0
    %522 = vmatprep.subr.mxu0 0.0
    %523 = vmatpush1.msra.mxu0 0.0
    %524 = vmatprep.subr.mxu0 0.0
    %525 = vmatpush1.msra.mxu0 0.0
    %526 = vmatprep.subr.mxu0 0.0
    %527 = vmatpush1.msra.mxu0 0.0
    %528 = vmatprep.subr.mxu0 0.0
    %529 = vmatpush1.msra.mxu0 0.0
    %530 = vmatprep.subr.mxu0 0.0
    %531 = vmatpush1.msra.mxu0 0.0
    %532 = vmatprep.subr.mxu0 0.0
    %533 = vmatpush1.msra.mxu0 0.0
    %534 = vmatprep.subr.mxu0 0.0
    %535 = vmatpush1.msra.mxu0 0.0
    %536 = vmatprep.subr.mxu0 0.0
    %537 = vmatpush1.msra.mxu0 0.0
    %538 = vmatprep.subr.mxu0 0.0
    %539 = vmatpush1.msra.mxu0 0.0
    %540 = vmatprep.subr.mxu0 0.0
    %541 = vmatpush1.msra.mxu0 0.0
    %542 = vmatprep.subr.mxu0 0.0
    %543 = vmatpush1.msra.mxu0 0.0
    %544 = vmatprep.subr.mxu0 0.0
    %545 = vmatpush1.msra.mxu0 0.0
    %546 = vmatprep.subr.mxu0 0.0
    %547 = vmatpush1.msra.mxu0 0.0
    %548 = vmatprep.subr.mxu0 0.0
    %549 = vmatpush1.msra.mxu0 0.0
    %550 = vmatprep.mubr.f32.mxu0 0.0
    %551 = vmatmul.mubr.f32.gmra.mrb[0].mxu0 %v374
    %v552 = vpop.f32.mrb[0].mxu0
    %v553 = vadd.f32 %v478, %v552
    %v554 = vpop.f32.mrb[0].mxu0
    %555 = vmatprep.mubr.f32.mxu0 0.0
    %556 = vmatmul.mubr.f32.gmra.mrb[0].mxu0 %v375
    %v557 = vpop.f32.mrb[0].mxu0
    %v558 = vadd.f32 %v483, %v557
    %v559 = vpop.f32.mrb[0].mxu0
    %560 = vdwg.mxu0
    %v561 = vld [vmem:[#allocation3 + $0x9] sm:$0xff]
    %v562 = vld [vmem:[#allocation3 + $0x11] sm:$0xff]
    %s563 = scalar_lea.vmem [#allocation9], 256
    %v564 = vld [vmem:[%s563] sm:$0xff]
    %v565 = vld [vmem:[%s563 + $0x8] sm:$0xff]
    %v566 = vld [vmem:[%s563 + $0x10] sm:$0xff]
    %v567 = vld [vmem:[%s563 + $0x18] sm:$0xff]
    %v568 = vld [vmem:[%s563 + $0x20] sm:$0xff]
    %v569 = vld [vmem:[%s563 + $0x28] sm:$0xff]
    %v570 = vld [vmem:[%s563 + $0x30] sm:$0xff]
    %v571 = vld [vmem:[%s563 + $0x38] sm:$0xff]
    %v572 = vld [vmem:[%s563 + $0x40] sm:$0xff]
    %v573 = vld [vmem:[%s563 + $0x48] sm:$0xff]
    %v574 = vld [vmem:[%s563 + $0x50] sm:$0xff]
    %v575 = vld [vmem:[%s563 + $0x58] sm:$0xff]
    %v576 = vld [vmem:[%s563 + $0x60] sm:$0xff]
    %v577 = vld [vmem:[%s563 + $0x68] sm:$0xff]
    %v578 = vld [vmem:[%s563 + $0x70] sm:$0xff]
    %v579 = vld [vmem:[%s563 + $0x78] sm:$0xff]
    %580 = vmatprep.subr.mxu0 0.0
    %581 = vmatpush1.msra.mxu0 %v564
    %582 = vmatprep.subr.mxu0 0.0
    %583 = vmatpush1.msra.mxu0 %v565
    %584 = vmatprep.subr.mxu0 0.0
    %585 = vmatpush1.msra.mxu0 %v566
    %586 = vmatprep.subr.mxu0 0.0
    %587 = vmatpush1.msra.mxu0 %v567
    %588 = vmatprep.subr.mxu0 0.0
    %589 = vmatpush1.msra.mxu0 %v568
    %590 = vmatprep.subr.mxu0 0.0
    %591 = vmatpush1.msra.mxu0 %v569
    %592 = vmatprep.subr.mxu0 0.0
    %593 = vmatpush1.msra.mxu0 %v570
    %594 = vmatprep.subr.mxu0 0.0
    %595 = vmatpush1.msra.mxu0 %v571
    %596 = vmatprep.subr.mxu0 0.0
    %597 = vmatpush1.msra.mxu0 %v572
    %598 = vmatprep.subr.mxu0 0.0
    %599 = vmatpush1.msra.mxu0 %v573
    %600 = vmatprep.subr.mxu0 0.0
    %601 = vmatpush1.msra.mxu0 %v574
    %602 = vmatprep.subr.mxu0 0.0
    %603 = vmatpush1.msra.mxu0 %v575
    %604 = vmatprep.subr.mxu0 0.0
    %605 = vmatpush1.msra.mxu0 %v576
    %606 = vmatprep.subr.mxu0 0.0
    %607 = vmatpush1.msra.mxu0 %v577
    %608 = vmatprep.subr.mxu0 0.0
    %609 = vmatpush1.msra.mxu0 %v578
    %610 = vmatprep.subr.mxu0 0.0
    %611 = vmatpush1.msra.mxu0 %v579
    %612 = vmatprep.subr.mxu0 0.0
    %613 = vmatpush1.msra.mxu0 0.0
    %614 = vmatprep.subr.mxu0 0.0
    %615 = vmatpush1.msra.mxu0 0.0
    %616 = vmatprep.subr.mxu0 0.0
    %617 = vmatpush1.msra.mxu0 0.0
    %618 = vmatprep.subr.mxu0 0.0
    %619 = vmatpush1.msra.mxu0 0.0
    %620 = vmatprep.subr.mxu0 0.0
    %621 = vmatpush1.msra.mxu0 0.0
    %622 = vmatprep.subr.mxu0 0.0
    %623 = vmatpush1.msra.mxu0 0.0
    %624 = vmatprep.subr.mxu0 0.0
    %625 = vmatpush1.msra.mxu0 0.0
    %626 = vmatprep.subr.mxu0 0.0
    %627 = vmatpush1.msra.mxu0 0.0
    %628 = vmatprep.subr.mxu0 0.0
    %629 = vmatpush1.msra.mxu0 0.0
    %630 = vmatprep.subr.mxu0 0.0
    %631 = vmatpush1.msra.mxu0 0.0
    %632 = vmatprep.subr.mxu0 0.0
    %633 = vmatpush1.msra.mxu0 0.0
    %634 = vmatprep.subr.mxu0 0.0
    %635 = vmatpush1.msra.mxu0 0.0
    %636 = vmatprep.subr.mxu0 0.0
    %637 = vmatpush1.msra.mxu0 0.0
    %638 = vmatprep.subr.mxu0 0.0
    %639 = vmatpush1.msra.mxu0 0.0
    %640 = vmatprep.subr.mxu0 0.0
    %641 = vmatpush1.msra.mxu0 0.0
    %642 = vmatprep.subr.mxu0 0.0
    %643 = vmatpush1.msra.mxu0 0.0
    %644 = vmatprep.mubr.f32.mxu0 0.0
    %645 = vmatmul.mubr.f32.gmra.mrb[0].mxu0 %v561
    %v646 = vpop.f32.mrb[0].mxu0
    %v647 = vadd.f32 0.0, %v646
    %v648 = vpop.f32.mrb[0].mxu0
    %649 = vmatprep.mubr.f32.mxu0 0.0
    %650 = vmatmul.mubr.f32.gmra.mrb[0].mxu0 %v562
    %v651 = vpop.f32.mrb[0].mxu0
    %v652 = vadd.f32 0.0, %v651
    %v653 = vpop.f32.mrb[0].mxu0
    %654 = vdwg.mxu0
    %v655 = vadd.f32 %v553, %v647
    %v656 = vadd.f32 %v558, %v652
    %v658 = vlaneseq
    %v659 = vshrl.u32 %v658, 7
    %v660 = vsub.s32 0, %v659
    %v661 = vrot.slane %v78, %v660
    %v663 = vadd.f32 %v655, %v661
    %v664 = vadd.f32 %v656, %v661
    %v665 = vld [vmem:[#allocation4] sm:$0xff]
    %v666 = vld [vmem:[#allocation4 + $0x8] sm:$0xff]
    %v667 = vadd.f32 %v663, %v665
    %v668 = vadd.f32 %v664, %v666
    %669 = vst [vmem:[#allocation10] sm:$0xff] %v667
    %670 = vst [vmem:[#allocation10 + $0x8] sm:$0xff] %v668
    %v671 = vld [vmem:[#allocation2 + $0x1f] sm:$0xff]
    %v672 = vld [vmem:[#allocation2 + $0x27] sm:$0xff]
    %v673 = vld [vmem:[#allocation7] sm:$0xff]
    %v674 = vld [vmem:[#allocation7 + $0x8] sm:$0xff]
    %v675 = vld [vmem:[#allocation7 + $0x10] sm:$0xff]
    %v676 = vld [vmem:[#allocation7 + $0x18] sm:$0xff]
    %v677 = vld [vmem:[#allocation7 + $0x20] sm:$0xff]
    %v678 = vld [vmem:[#allocation7 + $0x28] sm:$0xff]
    %v679 = vld [vmem:[#allocation7 + $0x30] sm:$0xff]
    %v680 = vld [vmem:[#allocation7 + $0x38] sm:$0xff]
    %v681 = vld [vmem:[#allocation7 + $0x40] sm:$0xff]
    %v682 = vld [vmem:[#allocation7 + $0x48] sm:$0xff]
    %v683 = vld [vmem:[#allocation7 + $0x50] sm:$0xff]
    %v684 = vld [vmem:[#allocation7 + $0x58] sm:$0xff]
    %v685 = vld [vmem:[#allocation7 + $0x60] sm:$0xff]
    %v686 = vld [vmem:[#allocation7 + $0x68] sm:$0xff]
    %v687 = vld [vmem:[#allocation7 + $0x70] sm:$0xff]
    %v688 = vld [vmem:[#allocation7 + $0x78] sm:$0xff]
    %v689 = vld [vmem:[#allocation2 + $0x20] sm:$0xff]
    %v690 = vld [vmem:[#allocation2 + $0x28] sm:$0xff]
    %v691 = vld [vmem:[%s99] sm:$0xff]
    %v692 = vld [vmem:[%s99 + $0x8] sm:$0xff]
    %v693 = vld [vmem:[%s99 + $0x10] sm:$0xff]
    %v694 = vld [vmem:[%s99 + $0x18] sm:$0xff]
    %v695 = vld [vmem:[%s99 + $0x20] sm:$0xff]
    %v696 = vld [vmem:[%s99 + $0x28] sm:$0xff]
    %v697 = vld [vmem:[%s99 + $0x30] sm:$0xff]
    %v698 = vld [vmem:[%s99 + $0x38] sm:$0xff]
    %v699 = vld [vmem:[%s99 + $0x40] sm:$0xff]
    %v700 = vld [vmem:[%s99 + $0x48] sm:$0xff]
    %v701 = vld [vmem:[%s99 + $0x50] sm:$0xff]
    %v702 = vld [vmem:[%s99 + $0x58] sm:$0xff]
    %v703 = vld [vmem:[%s99 + $0x60] sm:$0xff]
    %v704 = vld [vmem:[%s99 + $0x68] sm:$0xff]
    %v705 = vld [vmem:[%s99 + $0x70] sm:$0xff]
    %v706 = vld [vmem:[%s99 + $0x78] sm:$0xff]
    %707 = vmatprep.subr.mxu0 0.0
    %708 = vmatpush1.msra.mxu0 %v691
    %709 = vmatprep.subr.mxu0 0.0
    %710 = vmatpush1.msra.mxu0 %v692
    %711 = vmatprep.subr.mxu0 0.0
    %712 = vmatpush1.msra.mxu0 %v693
    %713 = vmatprep.subr.mxu0 0.0
    %714 = vmatpush1.msra.mxu0 %v694
    %715 = vmatprep.subr.mxu0 0.0
    %716 = vmatpush1.msra.mxu0 %v695
    %717 = vmatprep.subr.mxu0 0.0
    %718 = vmatpush1.msra.mxu0 %v696
    %719 = vmatprep.subr.mxu0 0.0
    %720 = vmatpush1.msra.mxu0 %v697
    %721 = vmatprep.subr.mxu0 0.0
    %722 = vmatpush1.msra.mxu0 %v698
    %723 = vmatprep.subr.mxu0 0.0
    %724 = vmatpush1.msra.mxu0 %v699
    %725 = vmatprep.subr.mxu0 0.0
    %726 = vmatpush1.msra.mxu0 %v700
    %727 = vmatprep.subr.mxu0 0.0
    %728 = vmatpush1.msra.mxu0 %v701
    %729 = vmatprep.subr.mxu0 0.0
    %730 = vmatpush1.msra.mxu0 %v702
    %731 = vmatprep.subr.mxu0 0.0
    %732 = vmatpush1.msra.mxu0 %v703
    %733 = vmatprep.subr.mxu0 0.0
    %734 = vmatpush1.msra.mxu0 %v704
    %735 = vmatprep.subr.mxu0 0.0
    %736 = vmatpush1.msra.mxu0 %v705
    %737 = vmatprep.subr.mxu0 0.0
    %738 = vmatpush1.msra.mxu0 %v706
    %739 = vmatprep.subr.mxu0 0.0
    %740 = vmatpush1.msra.mxu0 0.0
    %741 = vmatprep.subr.mxu0 0.0
    %742 = vmatpush1.msra.mxu0 0.0
    %743 = vmatprep.subr.mxu0 0.0
    %744 = vmatpush1.msra.mxu0 0.0
    %745 = vmatprep.subr.mxu0 0.0
    %746 = vmatpush1.msra.mxu0 0.0
    %747 = vmatprep.subr.mxu0 0.0
    %748 = vmatpush1.msra.mxu0 0.0
    %749 = vmatprep.subr.mxu0 0.0
    %750 = vmatpush1.msra.mxu0 0.0
    %751 = vmatprep.subr.mxu0 0.0
    %752 = vmatpush1.msra.mxu0 0.0
    %753 = vmatprep.subr.mxu0 0.0
    %754 = vmatpush1.msra.mxu0 0.0
    %755 = vmatprep.subr.mxu0 0.0
    %756 = vmatpush1.msra.mxu0 0.0
    %757 = vmatprep.subr.mxu0 0.0
    %758 = vmatpush1.msra.mxu0 0.0
    %759 = vmatprep.subr.mxu0 0.0
    %760 = vmatpush1.msra.mxu0 0.0
    %761 = vmatprep.subr.mxu0 0.0
    %762 = vmatpush1.msra.mxu0 0.0
    %763 = vmatprep.subr.mxu0 0.0
    %764 = vmatpush1.msra.mxu0 0.0
    %765 = vmatprep.subr.mxu0 0.0
    %766 = vmatpush1.msra.mxu0 0.0
    %767 = vmatprep.subr.mxu0 0.0
    %768 = vmatpush1.msra.mxu0 0.0
    %769 = vmatprep.subr.mxu0 0.0
    %770 = vmatpush1.msra.mxu0 0.0
    %771 = vmatprep.mubr.f32.mxu0 0.0
    %772 = vmatmul.mubr.f32.gmra.mrb[0].mxu0 %v689
    %v773 = vpop.f32.mrb[0].mxu0
    %v774 = vadd.f32 0.0, %v773
    %v775 = vpop.f32.mrb[0].mxu0
    %776 = vmatprep.mubr.f32.mxu0 0.0
    %777 = vmatmul.mubr.f32.gmra.mrb[0].mxu0 %v690
    %v778 = vpop.f32.mrb[0].mxu0
    %v779 = vadd.f32 0.0, %v778
    %v780 = vpop.f32.mrb[0].mxu0
    %781 = vdwg.mxu0
    %782 = vmatprep.subr.mxu0 0.0
    %783 = vmatpush1.msra.mxu0 %v673
    %784 = vmatprep.subr.mxu0 0.0
    %785 = vmatpush1.msra.mxu0 %v674
    %786 = vmatprep.subr.mxu0 0.0
    %787 = vmatpush1.msra.mxu0 %v675
    %788 = vmatprep.subr.mxu0 0.0
    %789 = vmatpush1.msra.mxu0 %v676
    %790 = vmatprep.subr.mxu0 0.0
    %791 = vmatpush1.msra.mxu0 %v677
    %792 = vmatprep.subr.mxu0 0.0
    %793 = vmatpush1.msra.mxu0 %v678
    %794 = vmatprep.subr.mxu0 0.0
    %795 = vmatpush1.msra.mxu0 %v679
    %796 = vmatprep.subr.mxu0 0.0
    %797 = vmatpush1.msra.mxu0 %v680
    %798 = vmatprep.subr.mxu0 0.0
    %799 = vmatpush1.msra.mxu0 %v681
    %800 = vmatprep.subr.mxu0 0.0
    %801 = vmatpush1.msra.mxu0 %v682
    %802 = vmatprep.subr.mxu0 0.0
    %803 = vmatpush1.msra.mxu0 %v683
    %804 = vmatprep.subr.mxu0 0.0
    %805 = vmatpush1.msra.mxu0 %v684
    %806 = vmatprep.subr.mxu0 0.0
    %807 = vmatpush1.msra.mxu0 %v685
    %808 = vmatprep.subr.mxu0 0.0
    %809 = vmatpush1.msra.mxu0 %v686
    %810 = vmatprep.subr.mxu0 0.0
    %811 = vmatpush1.msra.mxu0 %v687
    %812 = vmatprep.subr.mxu0 0.0
    %813 = vmatpush1.msra.mxu0 %v688
    %814 = vmatprep.subr.mxu0 0.0
    %815 = vmatpush1.msra.mxu0 0.0
    %816 = vmatprep.subr.mxu0 0.0
    %817 = vmatpush1.msra.mxu0 0.0
    %818 = vmatprep.subr.mxu0 0.0
    %819 = vmatpush1.msra.mxu0 0.0
    %820 = vmatprep.subr.mxu0 0.0
    %821 = vmatpush1.msra.mxu0 0.0
    %822 = vmatprep.subr.mxu0 0.0
    %823 = vmatpush1.msra.mxu0 0.0
    %824 = vmatprep.subr.mxu0 0.0
    %825 = vmatpush1.msra.mxu0 0.0
    %826 = vmatprep.subr.mxu0 0.0
    %827 = vmatpush1.msra.mxu0 0.0
    %828 = vmatprep.subr.mxu0 0.0
    %829 = vmatpush1.msra.mxu0 0.0
    %830 = vmatprep.subr.mxu0 0.0
    %831 = vmatpush1.msra.mxu0 0.0
    %832 = vmatprep.subr.mxu0 0.0
    %833 = vmatpush1.msra.mxu0 0.0
    %834 = vmatprep.subr.mxu0 0.0
    %835 = vmatpush1.msra.mxu0 0.0
    %836 = vmatprep.subr.mxu0 0.0
    %837 = vmatpush1.msra.mxu0 0.0
    %838 = vmatprep.subr.mxu0 0.0
    %839 = vmatpush1.msra.mxu0 0.0
    %840 = vmatprep.subr.mxu0 0.0
    %841 = vmatpush1.msra.mxu0 0.0
    %842 = vmatprep.subr.mxu0 0.0
    %843 = vmatpush1.msra.mxu0 0.0
    %844 = vmatprep.subr.mxu0 0.0
    %845 = vmatpush1.msra.mxu0 0.0
    %846 = vmatprep.mubr.f32.mxu0 0.0
    %847 = vmatmul.mubr.f32.gmra.mrb[0].mxu0 %v671
    %v848 = vpop.f32.mrb[0].mxu0
    %v849 = vadd.f32 %v774, %v848
    %v850 = vpop.f32.mrb[0].mxu0
    %851 = vmatprep.mubr.f32.mxu0 0.0
    %852 = vmatmul.mubr.f32.gmra.mrb[0].mxu0 %v672
    %v853 = vpop.f32.mrb[0].mxu0
    %v854 = vadd.f32 %v779, %v853
    %v855 = vpop.f32.mrb[0].mxu0
    %856 = vdwg.mxu0
    %v857 = vld [vmem:[#allocation2 + $0x21] sm:$0xff]
    %v858 = vld [vmem:[#allocation2 + $0x29] sm:$0xff]
    %v859 = vld [vmem:[%s268] sm:$0xff]
    %v860 = vld [vmem:[%s268 + $0x8] sm:$0xff]
    %v861 = vld [vmem:[%s268 + $0x10] sm:$0xff]
    %v862 = vld [vmem:[%s268 + $0x18] sm:$0xff]
    %v863 = vld [vmem:[%s268 + $0x20] sm:$0xff]
    %v864 = vld [vmem:[%s268 + $0x28] sm:$0xff]
    %v865 = vld [vmem:[%s268 + $0x30] sm:$0xff]
    %v866 = vld [vmem:[%s268 + $0x38] sm:$0xff]
    %v867 = vld [vmem:[%s268 + $0x40] sm:$0xff]
    %v868 = vld [vmem:[%s268 + $0x48] sm:$0xff]
    %v869 = vld [vmem:[%s268 + $0x50] sm:$0xff]
    %v870 = vld [vmem:[%s268 + $0x58] sm:$0xff]
    %v871 = vld [vmem:[%s268 + $0x60] sm:$0xff]
    %v872 = vld [vmem:[%s268 + $0x68] sm:$0xff]
    %v873 = vld [vmem:[%s268 + $0x70] sm:$0xff]
    %v874 = vld [vmem:[%s268 + $0x78] sm:$0xff]
    %875 = vmatprep.subr.mxu0 0.0
    %876 = vmatpush1.msra.mxu0 %v859
    %877 = vmatprep.subr.mxu0 0.0
    %878 = vmatpush1.msra.mxu0 %v860
    %879 = vmatprep.subr.mxu0 0.0
    %880 = vmatpush1.msra.mxu0 %v861
    %881 = vmatprep.subr.mxu0 0.0
    %882 = vmatpush1.msra.mxu0 %v862
    %883 = vmatprep.subr.mxu0 0.0
    %884 = vmatpush1.msra.mxu0 %v863
    %885 = vmatprep.subr.mxu0 0.0
    %886 = vmatpush1.msra.mxu0 %v864
    %887 = vmatprep.subr.mxu0 0.0
    %888 = vmatpush1.msra.mxu0 %v865
    %889 = vmatprep.subr.mxu0 0.0
    %890 = vmatpush1.msra.mxu0 %v866
    %891 = vmatprep.subr.mxu0 0.0
    %892 = vmatpush1.msra.mxu0 %v867
    %893 = vmatprep.subr.mxu0 0.0
    %894 = vmatpush1.msra.mxu0 %v868
    %895 = vmatprep.subr.mxu0 0.0
    %896 = vmatpush1.msra.mxu0 %v869
    %897 = vmatprep.subr.mxu0 0.0
    %898 = vmatpush1.msra.mxu0 %v870
    %899 = vmatprep.subr.mxu0 0.0
    %900 = vmatpush1.msra.mxu0 %v871
    %901 = vmatprep.subr.mxu0 0.0
    %902 = vmatpush1.msra.mxu0 %v872
    %903 = vmatprep.subr.mxu0 0.0
    %904 = vmatpush1.msra.mxu0 %v873
    %905 = vmatprep.subr.mxu0 0.0
    %906 = vmatpush1.msra.mxu0 %v874
    %907 = vmatprep.subr.mxu0 0.0
    %908 = vmatpush1.msra.mxu0 0.0
    %909 = vmatprep.subr.mxu0 0.0
    %910 = vmatpush1.msra.mxu0 0.0
    %911 = vmatprep.subr.mxu0 0.0
    %912 = vmatpush1.msra.mxu0 0.0
    %913 = vmatprep.subr.mxu0 0.0
    %914 = vmatpush1.msra.mxu0 0.0
    %915 = vmatprep.subr.mxu0 0.0
    %916 = vmatpush1.msra.mxu0 0.0
    %917 = vmatprep.subr.mxu0 0.0
    %918 = vmatpush1.msra.mxu0 0.0
    %919 = vmatprep.subr.mxu0 0.0
    %920 = vmatpush1.msra.mxu0 0.0
    %921 = vmatprep.subr.mxu0 0.0
    %922 = vmatpush1.msra.mxu0 0.0
    %923 = vmatprep.subr.mxu0 0.0
    %924 = vmatpush1.msra.mxu0 0.0
    %925 = vmatprep.subr.mxu0 0.0
    %926 = vmatpush1.msra.mxu0 0.0
    %927 = vmatprep.subr.mxu0 0.0
    %928 = vmatpush1.msra.mxu0 0.0
    %929 = vmatprep.subr.mxu0 0.0
    %930 = vmatpush1.msra.mxu0 0.0
    %931 = vmatprep.subr.mxu0 0.0
    %932 = vmatpush1.msra.mxu0 0.0
    %933 = vmatprep.subr.mxu0 0.0
    %934 = vmatpush1.msra.mxu0 0.0
    %935 = vmatprep.subr.mxu0 0.0
    %936 = vmatpush1.msra.mxu0 0.0
    %937 = vmatprep.subr.mxu0 0.0
    %938 = vmatpush1.msra.mxu0 0.0
    %939 = vmatprep.mubr.f32.mxu0 0.0
    %940 = vmatmul.mubr.f32.gmra.mrb[0].mxu0 %v857
    %v941 = vpop.f32.mrb[0].mxu0
    %v942 = vadd.f32 0.0, %v941
    %v943 = vpop.f32.mrb[0].mxu0
    %944 = vmatprep.mubr.f32.mxu0 0.0
    %945 = vmatmul.mubr.f32.gmra.mrb[0].mxu0 %v858
    %v946 = vpop.f32.mrb[0].mxu0
    %v947 = vadd.f32 0.0, %v946
    %v948 = vpop.f32.mrb[0].mxu0
    %949 = vdwg.mxu0
    %v950 = vadd.f32 %v849, %v942
    %v951 = vadd.f32 %v854, %v947
    %v952 = vadd.f32 %v950, %v366
    %v953 = vadd.f32 %v951, %v366
    %v954 = vmax.f32 %v952, 0.0
    %v955 = vmax.f32 %v953, 0.0
    %956 = vst [vmem:[#allocation3 + $0x20] sm:$0xff] %v954
    %957 = vst [vmem:[#allocation3 + $0x28] sm:$0xff] %v955
    %v958 = vld [vmem:[#allocation3 + $0x1f] sm:$0xff]
    %v959 = vld [vmem:[#allocation3 + $0x27] sm:$0xff]
    %v960 = vld [vmem:[#allocation9] sm:$0xff]
    %v961 = vld [vmem:[#allocation9 + $0x8] sm:$0xff]
    %v962 = vld [vmem:[#allocation9 + $0x10] sm:$0xff]
    %v963 = vld [vmem:[#allocation9 + $0x18] sm:$0xff]
    %v964 = vld [vmem:[#allocation9 + $0x20] sm:$0xff]
    %v965 = vld [vmem:[#allocation9 + $0x28] sm:$0xff]
    %v966 = vld [vmem:[#allocation9 + $0x30] sm:$0xff]
    %v967 = vld [vmem:[#allocation9 + $0x38] sm:$0xff]
    %v968 = vld [vmem:[#allocation9 + $0x40] sm:$0xff]
    %v969 = vld [vmem:[#allocation9 + $0x48] sm:$0xff]
    %v970 = vld [vmem:[#allocation9 + $0x50] sm:$0xff]
    %v971 = vld [vmem:[#allocation9 + $0x58] sm:$0xff]
    %v972 = vld [vmem:[#allocation9 + $0x60] sm:$0xff]
    %v973 = vld [vmem:[#allocation9 + $0x68] sm:$0xff]
    %v974 = vld [vmem:[#allocation9 + $0x70] sm:$0xff]
    %v975 = vld [vmem:[#allocation9 + $0x78] sm:$0xff]
    %v976 = vld [vmem:[#allocation3 + $0x20] sm:$0xff]
    %v977 = vld [vmem:[#allocation3 + $0x28] sm:$0xff]
    %v978 = vld [vmem:[%s394] sm:$0xff]
    %v979 = vld [vmem:[%s394 + $0x8] sm:$0xff]
    %v980 = vld [vmem:[%s394 + $0x10] sm:$0xff]
    %v981 = vld [vmem:[%s394 + $0x18] sm:$0xff]
    %v982 = vld [vmem:[%s394 + $0x20] sm:$0xff]
    %v983 = vld [vmem:[%s394 + $0x28] sm:$0xff]
    %v984 = vld [vmem:[%s394 + $0x30] sm:$0xff]
    %v985 = vld [vmem:[%s394 + $0x38] sm:$0xff]
    %v986 = vld [vmem:[%s394 + $0x40] sm:$0xff]
    %v987 = vld [vmem:[%s394 + $0x48] sm:$0xff]
    %v988 = vld [vmem:[%s394 + $0x50] sm:$0xff]
    %v989 = vld [vmem:[%s394 + $0x58] sm:$0xff]
    %v990 = vld [vmem:[%s394 + $0x60] sm:$0xff]
    %v991 = vld [vmem:[%s394 + $0x68] sm:$0xff]
    %v992 = vld [vmem:[%s394 + $0x70] sm:$0xff]
    %v993 = vld [vmem:[%s394 + $0x78] sm:$0xff]
    %994 = vmatprep.subr.mxu0 0.0
    %995 = vmatpush1.msra.mxu0 %v978
    %996 = vmatprep.subr.mxu0 0.0
    %997 = vmatpush1.msra.mxu0 %v979
    %998 = vmatprep.subr.mxu0 0.0
    %999 = vmatpush1.msra.mxu0 %v980
    %1000 = vmatprep.subr.mxu0 0.0
    %1001 = vmatpush1.msra.mxu0 %v981
    %1002 = vmatprep.subr.mxu0 0.0
    %1003 = vmatpush1.msra.mxu0 %v982
    %1004 = vmatprep.subr.mxu0 0.0
    %1005 = vmatpush1.msra.mxu0 %v983
    %1006 = vmatprep.subr.mxu0 0.0
    %1007 = vmatpush1.msra.mxu0 %v984
    %1008 = vmatprep.subr.mxu0 0.0
    %1009 = vmatpush1.msra.mxu0 %v985
    %1010 = vmatprep.subr.mxu0 0.0
    %1011 = vmatpush1.msra.mxu0 %v986
    %1012 = vmatprep.subr.mxu0 0.0
    %1013 = vmatpush1.msra.mxu0 %v987
    %1014 = vmatprep.subr.mxu0 0.0
    %1015 = vmatpush1.msra.mxu0 %v988
    %1016 = vmatprep.subr.mxu0 0.0
    %1017 = vmatpush1.msra.mxu0 %v989
    %1018 = vmatprep.subr.mxu0 0.0
    %1019 = vmatpush1.msra.mxu0 %v990
    %1020 = vmatprep.subr.mxu0 0.0
    %1021 = vmatpush1.msra.mxu0 %v991
    %1022 = vmatprep.subr.mxu0 0.0
    %1023 = vmatpush1.msra.mxu0 %v992
    %1024 = vmatprep.subr.mxu0 0.0
    %1025 = vmatpush1.msra.mxu0 %v993
    %1026 = vmatprep.subr.mxu0 0.0
    %1027 = vmatpush1.msra.mxu0 0.0
    %1028 = vmatprep.subr.mxu0 0.0
    %1029 = vmatpush1.msra.mxu0 0.0
    %1030 = vmatprep.subr.mxu0 0.0
    %1031 = vmatpush1.msra.mxu0 0.0
    %1032 = vmatprep.subr.mxu0 0.0
    %1033 = vmatpush1.msra.mxu0 0.0
    %1034 = vmatprep.subr.mxu0 0.0
    %1035 = vmatpush1.msra.mxu0 0.0
    %1036 = vmatprep.subr.mxu0 0.0
    %1037 = vmatpush1.msra.mxu0 0.0
    %1038 = vmatprep.subr.mxu0 0.0
    %1039 = vmatpush1.msra.mxu0 0.0
    %1040 = vmatprep.subr.mxu0 0.0
    %1041 = vmatpush1.msra.mxu0 0.0
    %1042 = vmatprep.subr.mxu0 0.0
    %1043 = vmatpush1.msra.mxu0 0.0
    %1044 = vmatprep.subr.mxu0 0.0
    %1045 = vmatpush1.msra.mxu0 0.0
    %1046 = vmatprep.subr.mxu0 0.0
    %1047 = vmatpush1.msra.mxu0 0.0
    %1048 = vmatprep.subr.mxu0 0.0
    %1049 = vmatpush1.msra.mxu0 0.0
    %1050 = vmatprep.subr.mxu0 0.0
    %1051 = vmatpush1.msra.mxu0 0.0
    %1052 = vmatprep.subr.mxu0 0.0
    %1053 = vmatpush1.msra.mxu0 0.0
    %1054 = vmatprep.subr.mxu0 0.0
    %1055 = vmatpush1.msra.mxu0 0.0
    %1056 = vmatprep.subr.mxu0 0.0
    %1057 = vmatpush1.msra.mxu0 0.0
    %1058 = vmatprep.mubr.f32.mxu0 0.0
    %1059 = vmatmul.mubr.f32.gmra.mrb[0].mxu0 %v976
    %v1060 = vpop.f32.mrb[0].mxu0
    %v1061 = vadd.f32 0.0, %v1060
    %v1062 = vpop.f32.mrb[0].mxu0
    %1063 = vmatprep.mubr.f32.mxu0 0.0
    %1064 = vmatmul.mubr.f32.gmra.mrb[0].mxu0 %v977
    %v1065 = vpop.f32.mrb[0].mxu0
    %v1066 = vadd.f32 0.0, %v1065
    %v1067 = vpop.f32.mrb[0].mxu0
    %1068 = vdwg.mxu0
    %1069 = vmatprep.subr.mxu0 0.0
    %1070 = vmatpush1.msra.mxu0 %v960
    %1071 = vmatprep.subr.mxu0 0.0
    %1072 = vmatpush1.msra.mxu0 %v961
    %1073 = vmatprep.subr.mxu0 0.0
    %1074 = vmatpush1.msra.mxu0 %v962
    %1075 = vmatprep.subr.mxu0 0.0
    %1076 = vmatpush1.msra.mxu0 %v963
    %1077 = vmatprep.subr.mxu0 0.0
    %1078 = vmatpush1.msra.mxu0 %v964
    %1079 = vmatprep.subr.mxu0 0.0
    %1080 = vmatpush1.msra.mxu0 %v965
    %1081 = vmatprep.subr.mxu0 0.0
    %1082 = vmatpush1.msra.mxu0 %v966
    %1083 = vmatprep.subr.mxu0 0.0
    %1084 = vmatpush1.msra.mxu0 %v967
    %1085 = vmatprep.subr.mxu0 0.0
    %1086 = vmatpush1.msra.mxu0 %v968
    %1087 = vmatprep.subr.mxu0 0.0
    %1088 = vmatpush1.msra.mxu0 %v969
    %1089 = vmatprep.subr.mxu0 0.0
    %1090 = vmatpush1.msra.mxu0 %v970
    %1091 = vmatprep.subr.mxu0 0.0
    %1092 = vmatpush1.msra.mxu0 %v971
    %1093 = vmatprep.subr.mxu0 0.0
    %1094 = vmatpush1.msra.mxu0 %v972
    %1095 = vmatprep.subr.mxu0 0.0
    %1096 = vmatpush1.msra.mxu0 %v973
    %1097 = vmatprep.subr.mxu0 0.0
    %1098 = vmatpush1.msra.mxu0 %v974
    %1099 = vmatprep.subr.mxu0 0.0
    %1100 = vmatpush1.msra.mxu0 %v975
    %1101 = vmatprep.subr.mxu0 0.0
    %1102 = vmatpush1.msra.mxu0 0.0
    %1103 = vmatprep.subr.mxu0 0.0
    %1104 = vmatpush1.msra.mxu0 0.0
    %1105 = vmatprep.subr.mxu0 0.0
    %1106 = vmatpush1.msra.mxu0 0.0
    %1107 = vmatprep.subr.mxu0 0.0
    %1108 = vmatpush1.msra.mxu0 0.0
    %1109 = vmatprep.subr.mxu0 0.0
    %1110 = vmatpush1.msra.mxu0 0.0
    %1111 = vmatprep.subr.mxu0 0.0
    %1112 = vmatpush1.msra.mxu0 0.0
    %1113 = vmatprep.subr.mxu0 0.0
    %1114 = vmatpush1.msra.mxu0 0.0
    %1115 = vmatprep.subr.mxu0 0.0
    %1116 = vmatpush1.msra.mxu0 0.0
    %1117 = vmatprep.subr.mxu0 0.0
    %1118 = vmatpush1.msra.mxu0 0.0
    %1119 = vmatprep.subr.mxu0 0.0
    %1120 = vmatpush1.msra.mxu0 0.0
    %1121 = vmatprep.subr.mxu0 0.0
    %1122 = vmatpush1.msra.mxu0 0.0
    %1123 = vmatprep.subr.mxu0 0.0
    %1124 = vmatpush1.msra.mxu0 0.0
    %1125 = vmatprep.subr.mxu0 0.0
    %1126 = vmatpush1.msra.mxu0 0.0
    %1127 = vmatprep.subr.mxu0 0.0
    %1128 = vmatpush1.msra.mxu0 0.0
    %1129 = vmatprep.subr.mxu0 0.0
    %1130 = vmatpush1.msra.mxu0 0.0
    %1131 = vmatprep.subr.mxu0 0.0
    %1132 = vmatpush1.msra.mxu0 0.0
    %1133 = vmatprep.mubr.f32.mxu0 0.0
    %1134 = vmatmul.mubr.f32.gmra.mrb[0].mxu0 %v958
    %v1135 = vpop.f32.mrb[0].mxu0
    %v1136 = vadd.f32 %v1061, %v1135
    %v1137 = vpop.f32.mrb[0].mxu0
    %1138 = vmatprep.mubr.f32.mxu0 0.0
    %1139 = vmatmul.mubr.f32.gmra.mrb[0].mxu0 %v959
    %v1140 = vpop.f32.mrb[0].mxu0
    %v1141 = vadd.f32 %v1066, %v1140
    %v1142 = vpop.f32.mrb[0].mxu0
    %1143 = vdwg.mxu0
    %v1144 = vld [vmem:[#allocation3 + $0x21] sm:$0xff]
    %v1145 = vld [vmem:[#allocation3 + $0x29] sm:$0xff]
    %v1146 = vld [vmem:[%s563] sm:$0xff]
    %v1147 = vld [vmem:[%s563 + $0x8] sm:$0xff]
    %v1148 = vld [vmem:[%s563 + $0x10] sm:$0xff]
    %v1149 = vld [vmem:[%s563 + $0x18] sm:$0xff]
    %v1150 = vld [vmem:[%s563 + $0x20] sm:$0xff]
    %v1151 = vld [vmem:[%s563 + $0x28] sm:$0xff]
    %v1152 = vld [vmem:[%s563 + $0x30] sm:$0xff]
    %v1153 = vld [vmem:[%s563 + $0x38] sm:$0xff]
    %v1154 = vld [vmem:[%s563 + $0x40] sm:$0xff]
    %v1155 = vld [vmem:[%s563 + $0x48] sm:$0xff]
    %v1156 = vld [vmem:[%s563 + $0x50] sm:$0xff]
    %v1157 = vld [vmem:[%s563 + $0x58] sm:$0xff]
    %v1158 = vld [vmem:[%s563 + $0x60] sm:$0xff]
    %v1159 = vld [vmem:[%s563 + $0x68] sm:$0xff]
    %v1160 = vld [vmem:[%s563 + $0x70] sm:$0xff]
    %v1161 = vld [vmem:[%s563 + $0x78] sm:$0xff]
    %1162 = vmatprep.subr.mxu0 0.0
    %1163 = vmatpush1.msra.mxu0 %v1146
    %1164 = vmatprep.subr.mxu0 0.0
    %1165 = vmatpush1.msra.mxu0 %v1147
    %1166 = vmatprep.subr.mxu0 0.0
    %1167 = vmatpush1.msra.mxu0 %v1148
    %1168 = vmatprep.subr.mxu0 0.0
    %1169 = vmatpush1.msra.mxu0 %v1149
    %1170 = vmatprep.subr.mxu0 0.0
    %1171 = vmatpush1.msra.mxu0 %v1150
    %1172 = vmatprep.subr.mxu0 0.0
    %1173 = vmatpush1.msra.mxu0 %v1151
    %1174 = vmatprep.subr.mxu0 0.0
    %1175 = vmatpush1.msra.mxu0 %v1152
    %1176 = vmatprep.subr.mxu0 0.0
    %1177 = vmatpush1.msra.mxu0 %v1153
    %1178 = vmatprep.subr.mxu0 0.0
    %1179 = vmatpush1.msra.mxu0 %v1154
    %1180 = vmatprep.subr.mxu0 0.0
    %1181 = vmatpush1.msra.mxu0 %v1155
    %1182 = vmatprep.subr.mxu0 0.0
    %1183 = vmatpush1.msra.mxu0 %v1156
    %1184 = vmatprep.subr.mxu0 0.0
    %1185 = vmatpush1.msra.mxu0 %v1157
    %1186 = vmatprep.subr.mxu0 0.0
    %1187 = vmatpush1.msra.mxu0 %v1158
    %1188 = vmatprep.subr.mxu0 0.0
    %1189 = vmatpush1.msra.mxu0 %v1159
    %1190 = vmatprep.subr.mxu0 0.0
    %1191 = vmatpush1.msra.mxu0 %v1160
    %1192 = vmatprep.subr.mxu0 0.0
    %1193 = vmatpush1.msra.mxu0 %v1161
    %1194 = vmatprep.subr.mxu0 0.0
    %1195 = vmatpush1.msra.mxu0 0.0
    %1196 = vmatprep.subr.mxu0 0.0
    %1197 = vmatpush1.msra.mxu0 0.0
    %1198 = vmatprep.subr.mxu0 0.0
    %1199 = vmatpush1.msra.mxu0 0.0
    %1200 = vmatprep.subr.mxu0 0.0
    %1201 = vmatpush1.msra.mxu0 0.0
    %1202 = vmatprep.subr.mxu0 0.0
    %1203 = vmatpush1.msra.mxu0 0.0
    %1204 = vmatprep.subr.mxu0 0.0
    %1205 = vmatpush1.msra.mxu0 0.0
    %1206 = vmatprep.subr.mxu0 0.0
    %1207 = vmatpush1.msra.mxu0 0.0
    %1208 = vmatprep.subr.mxu0 0.0
    %1209 = vmatpush1.msra.mxu0 0.0
    %1210 = vmatprep.subr.mxu0 0.0
    %1211 = vmatpush1.msra.mxu0 0.0
    %1212 = vmatprep.subr.mxu0 0.0
    %1213 = vmatpush1.msra.mxu0 0.0
    %1214 = vmatprep.subr.mxu0 0.0
    %1215 = vmatpush1.msra.mxu0 0.0
    %1216 = vmatprep.subr.mxu0 0.0
    %1217 = vmatpush1.msra.mxu0 0.0
    %1218 = vmatprep.subr.mxu0 0.0
    %1219 = vmatpush1.msra.mxu0 0.0
    %1220 = vmatprep.subr.mxu0 0.0
    %1221 = vmatpush1.msra.mxu0 0.0
    %1222 = vmatprep.subr.mxu0 0.0
    %1223 = vmatpush1.msra.mxu0 0.0
    %1224 = vmatprep.subr.mxu0 0.0
    %1225 = vmatpush1.msra.mxu0 0.0
    %1226 = vmatprep.mubr.f32.mxu0 0.0
    %1227 = vmatmul.mubr.f32.gmra.mrb[0].mxu0 %v1144
    %v1228 = vpop.f32.mrb[0].mxu0
    %v1229 = vadd.f32 0.0, %v1228
    %v1230 = vpop.f32.mrb[0].mxu0
    %1231 = vmatprep.mubr.f32.mxu0 0.0
    %1232 = vmatmul.mubr.f32.gmra.mrb[0].mxu0 %v1145
    %v1233 = vpop.f32.mrb[0].mxu0
    %v1234 = vadd.f32 0.0, %v1233
    %v1235 = vpop.f32.mrb[0].mxu0
    %1236 = vdwg.mxu0
    %v1237 = vadd.f32 %v1136, %v1229
    %v1238 = vadd.f32 %v1141, %v1234
    %v1239 = vadd.f32 %v1237, %v661
    %v1240 = vadd.f32 %v1238, %v661
    %v1241 = vld [vmem:[%s72] sm:$0xff]
    %v1242 = vld [vmem:[%s72 + $0x8] sm:$0xff]
    %v1243 = vadd.f32 %v1239, %v1241
    %v1244 = vadd.f32 %v1240, %v1242
    %s1245 = scalar_lea.vmem [#allocation10], 16
    %1246 = vst [vmem:[%s1245] sm:$0xff] %v1243
    %1247 = vst [vmem:[%s1245 + $0x8] sm:$0xff] %v1244
    // Predicated region
    $region34: #{tpu_custom_call.1} parent=1 // pred_check
      _
    $region35: #{tpu_custom_call.1} parent=1 // pred_check_branch
      %1249 = sbr.rel (0) target = $region37
    $region36: #{tpu_custom_call.1} parent=1 // pred_region
      %s1251 = ssub.s32 512, 512
      %1252 = vsyncadd [#allocation6], %s1251
      %s1253 = sshll.u32 [#allocation10], 4
      %s1254 = int_to_ptr.vmem [resolvable:$true] %s1253
      %1259 = dma.vmem_to_hbm [thread:$0]  %s1254, 512, %s5, [#allocation6], 128, 128, 8
    $region37: #{tpu_custom_call.1} parent=1 // pred_fallthru
      _
    // Predicated region
    $region38: #{tpu_custom_call.1} parent=1 // pred_check
      _
    $region39: #{tpu_custom_call.1} parent=1 // pred_check_branch
      %1261 = sbr.rel (0) target = $region41
    $region40: #{tpu_custom_call.1} parent=1 // pred_region
      %1262 = dma.done [#allocation6], 512
    $region41: #{tpu_custom_call.1} parent=1 // pred_fallthru
      _
    %1263 = vsyncpa [#allocation5], 1
    %1264 = vsyncpa [#allocation8], 1
    %1265 = vsyncpa [#allocation6], 1

</llo_original>
